<compile_context>
chip_gen: v7x
topology: tpu7x:2x2x1
jax: 0.10.0
libtpu: 0.0.40
codegen_flags: <defaults>
</compile_context>

<pallas_src>
import functools

import jax
import jax.numpy as jnp
from jax import lax
from jax.experimental import pallas as pl
from jax.experimental.pallas import tpu as pltpu

CONTEXT = 32
EMB_DIMS = 128


def _mha_kernel(x_ref, w_ref, o_ref, *, batch, seq_len, num_heads, head_size):
    # x_ref : (B*T, D)       all batch elements, f32
    # w_ref : (D, 3*H*hs)    fused [Q | K | V] projections, bf16, Q pre-scaled
    # o_ref : (B*T, H*hs)    output in torch.cat(dim=-1) layout
    T = seq_len
    HH = num_heads * head_size

    x = x_ref[...].astype(jnp.bfloat16)            # bf16 MXU operand (cheap VPU cast)
    w = w_ref[...]                                 # already bf16

    # ONE fused QKV projection for all batch elements and all heads.
    qkv = jnp.dot(x, w, preferred_element_type=jnp.float32)     # (B*T, 3*H*hs) f32

    # Causal mask built once, reused for every (batch, head) pair.
    row = lax.broadcasted_iota(jnp.int32, (T, T), 0)
    col = lax.broadcasted_iota(jnp.int32, (T, T), 1)
    causal = row >= col
    neg = jnp.float32(-1e30)                       # finite -> NaN-safe masking

    for b in range(batch):                         # static loop; 32-row sublane slices
        r0 = b * T
        q = qkv[r0:r0 + T, 0 * HH:1 * HH]          # already scaled by hs**-0.5 (folded into W)
        k = qkv[r0:r0 + T, 1 * HH:2 * HH]
        v = qkv[r0:r0 + T, 2 * HH:3 * HH]

        for h in range(num_heads):                 # static loop, H small
            c0 = h * head_size
            qh = q[:, c0:c0 + head_size]
            kh = k[:, c0:c0 + head_size]
            vh = v[:, c0:c0 + head_size]

            # q @ k^T contracting the last dims (no explicit transpose of K).
            s = lax.dot_general(qh, kh, (((1,), (1,)), ((), ())),
                                preferred_element_type=jnp.float32)   # (T, T)
            s = jnp.where(causal, s, neg)
            s = s - jnp.max(s, axis=-1, keepdims=True)
            p = jnp.exp(s)
            # EUP approximate reciprocal for the softmax denominator.
            p = p * pl.reciprocal(jnp.sum(p, axis=-1, keepdims=True), approx=True)

            oh = jnp.dot(p.astype(jnp.bfloat16), vh.astype(jnp.bfloat16),
                         preferred_element_type=jnp.float32)          # (T, hs)

            # Direct store into the concat-head layout (no lane-axis concat).
            o_ref[r0:r0 + T, c0:c0 + head_size] = oh.astype(o_ref.dtype)


def init_fused_qkv_weight(wq, wk, wv):
    """One-time parameter-init step (hoisted out of the forward pass).

    wq/wk/wv: (H, D, hs) pre-transposed nn.Linear weights.
    Returns the fused (D, 3*H*hs) bf16 weight with the 1/sqrt(head_size)
    attention scale folded into the Q columns.
    """
    H, D, hs = wq.shape

    def _flat(w):                                  # (H, D, hs) -> (D, H*hs), head-major cols
        return jnp.transpose(w, (1, 0, 2)).reshape(D, H * hs)

    w_qkv = jnp.concatenate(
        [_flat(wq) * (hs ** -0.5), _flat(wk), _flat(wv)], axis=-1)    # (D, 3*H*hs)
    return w_qkv.astype(jnp.bfloat16)


def decoder_multi_head_attention(x, w_qkv, num_heads, head_size):
    """x: (B, T, D); w_qkv: (D, 3*H*hs) bf16 from init_fused_qkv_weight.

    Returns (B, T, H*hs) == torch.cat([head_h(x) for h in heads], dim=-1).
    """
    B, T, D = x.shape
    HH = num_heads * head_size
    assert D == EMB_DIMS and T <= CONTEXT
    assert w_qkv.shape == (D, 3 * HH)

    kernel = functools.partial(_mha_kernel, batch=B, seq_len=T,
                               num_heads=num_heads, head_size=head_size)

    # Single gridless step: whole problem (<150 KiB) lives in VMEM at once.
    out_flat = pl.pallas_call(
        kernel,
        out_shape=jax.ShapeDtypeStruct((B * T, HH), x.dtype),
        in_specs=[
            pl.BlockSpec(memory_space=pltpu.MemorySpace.VMEM),   # x  (B*T, D)
            pl.BlockSpec(memory_space=pltpu.MemorySpace.VMEM),   # fused W
        ],
        out_specs=pl.BlockSpec(memory_space=pltpu.MemorySpace.VMEM),
    )(x.reshape(B * T, D), w_qkv)

    return out_flat.reshape(B, T, HH)              # contiguous reshape, free


def _reference(x, wq, wk, wv):
    H, D, hs = wq.shape
    outs = []
    for h in range(H):
        q = x @ wq[h]
        k = x @ wk[h]
        v = x @ wv[h]
        s = q @ jnp.swapaxes(k, -2, -1) * (hs ** -0.5)
        T = x.shape[1]
        mask = jnp.tril(jnp.ones((T, T), dtype=bool))
        s = jnp.where(mask, s, -jnp.inf)
        p = jax.nn.softmax(s, axis=-1)
        outs.append(p @ v)
    return jnp.concatenate(outs, axis=-1)


if __name__ == "__main__":
    B, T, D = 2, CONTEXT, EMB_DIMS
    num_heads, head_size = 4, 16

    key = jax.random.PRNGKey(0)
    kx, kq, kk, kv = jax.random.split(key, 4)
    x = jax.random.normal(kx, (B, T, D), dtype=jnp.float32)
    # deterministic "Linear" weights (pre-transposed: (H, D, head_size))
    wq = jax.random.normal(kq, (num_heads, D, head_size), dtype=jnp.float32) * 0.05
    wk = jax.random.normal(kk, (num_heads, D, head_size), dtype=jnp.float32) * 0.05
    wv = jax.random.normal(kv, (num_heads, D, head_size), dtype=jnp.float32) * 0.05

    # Fused bf16 QKV weight built ONCE at "parameter init" time.
    w_qkv = jax.block_until_ready(init_fused_qkv_weight(wq, wk, wv))

    out = decoder_multi_head_attention(x, w_qkv, num_heads, head_size)
    out = jax.block_until_ready(out)

    ref = _reference(x, wq, wk, wv)
    assert out.shape == (B, T, num_heads * head_size)
    # Tolerance reflects bf16 MXU operands (projection and p@v matmuls) plus the
    # EUP approximate reciprocal in the softmax; softmax math itself is f32.
    assert jnp.allclose(out, ref, atol=2e-2, rtol=2e-2), \
        float(jnp.max(jnp.abs(out - ref)))
    print("KERNEL_OK")
</pallas_src>

<mosaic_0001>
module attributes {stable_mosaic.version = 11 : i64} {
  func.func @_mha_kernel(%arg0: memref<64x128xf32, #tpu.memory_space<vmem>>, %arg1: memref<128x192xbf16, #tpu.memory_space<vmem>>, %arg2: memref<64x64xf32, #tpu.memory_space<vmem>>) attributes {dimension_semantics = [], scalar_prefetch = 0 : i64, scratch_operands = 0 : i64, tpu.core_type = #tpu.core_type<tc>} {
    %c0 = arith.constant 0 : index
    %c0_0 = arith.constant 0 : index
    %0 = vector.load %arg0[%c0, %c0_0] : memref<64x128xf32, #tpu.memory_space<vmem>>, vector<64x128xf32>
    %1 = arith.truncf %0 : vector<64x128xf32> to vector<64x128xbf16>
    %c0_1 = arith.constant 0 : index
    %c0_2 = arith.constant 0 : index
    %2 = vector.load %arg1[%c0_1, %c0_2] : memref<128x192xbf16, #tpu.memory_space<vmem>>, vector<128x192xbf16>
    %cst = arith.constant dense<0.000000e+00> : vector<64x192xf32>
    %3 = tpu.matmul %1, %2, %cst {dimension_numbers = #tpu.dot_dimension_numbers<[1], [0], [0], [1], [0, 0, 1, 1], [], []>} : vector<64x128xbf16>, vector<128x192xbf16>, vector<64x192xf32> -> vector<64x192xf32>
    %4 = tpu.iota {dimensions = array<i32: 0>} : vector<32x32xi32>
    %5 = tpu.iota {dimensions = array<i32: 1>} : vector<32x32xi32>
    %6 = arith.cmpi sge, %4, %5 : vector<32x32xi32>
    %7 = vector.extract_strided_slice %3 {offsets = [0, 0], sizes = [32, 64], strides = [1, 1]} : vector<64x192xf32> to vector<32x64xf32>
    %8 = vector.extract_strided_slice %3 {offsets = [0, 64], sizes = [32, 64], strides = [1, 1]} : vector<64x192xf32> to vector<32x64xf32>
    %9 = vector.extract_strided_slice %3 {offsets = [0, 128], sizes = [32, 64], strides = [1, 1]} : vector<64x192xf32> to vector<32x64xf32>
    %10 = vector.extract_strided_slice %7 {offsets = [0, 0], sizes = [32, 16], strides = [1, 1]} : vector<32x64xf32> to vector<32x16xf32>
    %11 = vector.extract_strided_slice %8 {offsets = [0, 0], sizes = [32, 16], strides = [1, 1]} : vector<32x64xf32> to vector<32x16xf32>
    %12 = vector.extract_strided_slice %9 {offsets = [0, 0], sizes = [32, 16], strides = [1, 1]} : vector<32x64xf32> to vector<32x16xf32>
    %cst_3 = arith.constant dense<0.000000e+00> : vector<32x32xf32>
    %13 = tpu.matmul %10, %11, %cst_3 {dimension_numbers = #tpu.dot_dimension_numbers<[1], [1], [0], [0], [0, 0, 1, 0], [], []>} : vector<32x16xf32>, vector<32x16xf32>, vector<32x32xf32> -> vector<32x32xf32>
    %cst_4 = arith.constant -1.000000e+30 : f32
    %14 = vector.broadcast %cst_4 : f32 to vector<32x32xf32>
    %15 = arith.select %6, %13, %14 : vector<32x32xi1>, vector<32x32xf32>
    %cst_5 = arith.constant dense<0xFF800000> : vector<32xf32>
    %16 = vector.multi_reduction <maximumf>, %15, %cst_5 [1] : vector<32x32xf32> to vector<32xf32>
    %17 = vector.shape_cast %16 : vector<32xf32> to vector<32x1xf32>
    %18 = vector.broadcast %17 : vector<32x1xf32> to vector<32x32xf32>
    %19 = arith.subf %15, %18 : vector<32x32xf32>
    %20 = math.exp %19 : vector<32x32xf32>
    %cst_6 = arith.constant dense<0.000000e+00> : vector<32xf32>
    %21 = vector.multi_reduction <add>, %20, %cst_6 [1] : vector<32x32xf32> to vector<32xf32>
    %22 = vector.shape_cast %21 : vector<32xf32> to vector<32x1xf32>
    %23 = tpu.reciprocal %22 {approx = true} : vector<32x1xf32> -> vector<32x1xf32>
    %24 = vector.broadcast %23 : vector<32x1xf32> to vector<32x32xf32>
    %25 = arith.mulf %20, %24 : vector<32x32xf32>
    %26 = arith.truncf %25 : vector<32x32xf32> to vector<32x32xbf16>
    %27 = arith.truncf %12 : vector<32x16xf32> to vector<32x16xbf16>
    %cst_7 = arith.constant dense<0.000000e+00> : vector<32x16xf32>
    %28 = tpu.matmul %26, %27, %cst_7 {dimension_numbers = #tpu.dot_dimension_numbers<[1], [0], [0], [1], [0, 0, 1, 1], [], []>} : vector<32x32xbf16>, vector<32x16xbf16>, vector<32x16xf32> -> vector<32x16xf32>
    %c0_8 = arith.constant 0 : index
    %c0_9 = arith.constant 0 : index
    %29 = vector.load %arg2[%c0_8, %c0_9] : memref<64x64xf32, #tpu.memory_space<vmem>>, vector<32x16xf32>
    tpu.vector_store %arg2[%c0_8, %c0_9], %28 {strides = array<i32>} : memref<64x64xf32, #tpu.memory_space<vmem>>, vector<32x16xf32>,
    %30 = vector.extract_strided_slice %7 {offsets = [0, 16], sizes = [32, 16], strides = [1, 1]} : vector<32x64xf32> to vector<32x16xf32>
    %31 = vector.extract_strided_slice %8 {offsets = [0, 16], sizes = [32, 16], strides = [1, 1]} : vector<32x64xf32> to vector<32x16xf32>
    %32 = vector.extract_strided_slice %9 {offsets = [0, 16], sizes = [32, 16], strides = [1, 1]} : vector<32x64xf32> to vector<32x16xf32>
    %cst_10 = arith.constant dense<0.000000e+00> : vector<32x32xf32>
    %33 = tpu.matmul %30, %31, %cst_10 {dimension_numbers = #tpu.dot_dimension_numbers<[1], [1], [0], [0], [0, 0, 1, 0], [], []>} : vector<32x16xf32>, vector<32x16xf32>, vector<32x32xf32> -> vector<32x32xf32>
    %cst_11 = arith.constant -1.000000e+30 : f32
    %34 = vector.broadcast %cst_11 : f32 to vector<32x32xf32>
    %35 = arith.select %6, %33, %34 : vector<32x32xi1>, vector<32x32xf32>
    %cst_12 = arith.constant dense<0xFF800000> : vector<32xf32>
    %36 = vector.multi_reduction <maximumf>, %35, %cst_12 [1] : vector<32x32xf32> to vector<32xf32>
    %37 = vector.shape_cast %36 : vector<32xf32> to vector<32x1xf32>
    %38 = vector.broadcast %37 : vector<32x1xf32> to vector<32x32xf32>
    %39 = arith.subf %35, %38 : vector<32x32xf32>
    %40 = math.exp %39 : vector<32x32xf32>
    %cst_13 = arith.constant dense<0.000000e+00> : vector<32xf32>
    %41 = vector.multi_reduction <add>, %40, %cst_13 [1] : vector<32x32xf32> to vector<32xf32>
    %42 = vector.shape_cast %41 : vector<32xf32> to vector<32x1xf32>
    %43 = tpu.reciprocal %42 {approx = true} : vector<32x1xf32> -> vector<32x1xf32>
    %44 = vector.broadcast %43 : vector<32x1xf32> to vector<32x32xf32>
    %45 = arith.mulf %40, %44 : vector<32x32xf32>
    %46 = arith.truncf %45 : vector<32x32xf32> to vector<32x32xbf16>
    %47 = arith.truncf %32 : vector<32x16xf32> to vector<32x16xbf16>
    %cst_14 = arith.constant dense<0.000000e+00> : vector<32x16xf32>
    %48 = tpu.matmul %46, %47, %cst_14 {dimension_numbers = #tpu.dot_dimension_numbers<[1], [0], [0], [1], [0, 0, 1, 1], [], []>} : vector<32x32xbf16>, vector<32x16xbf16>, vector<32x16xf32> -> vector<32x16xf32>
    %c0_15 = arith.constant 0 : index
    %c16 = arith.constant 16 : index
    %49 = vector.load %arg2[%c0_15, %c16] : memref<64x64xf32, #tpu.memory_space<vmem>>, vector<32x16xf32>
    tpu.vector_store %arg2[%c0_15, %c16], %48 {strides = array<i32>} : memref<64x64xf32, #tpu.memory_space<vmem>>, vector<32x16xf32>,
    %50 = vector.extract_strided_slice %7 {offsets = [0, 32], sizes = [32, 16], strides = [1, 1]} : vector<32x64xf32> to vector<32x16xf32>
    %51 = vector.extract_strided_slice %8 {offsets = [0, 32], sizes = [32, 16], strides = [1, 1]} : vector<32x64xf32> to vector<32x16xf32>
    %52 = vector.extract_strided_slice %9 {offsets = [0, 32], sizes = [32, 16], strides = [1, 1]} : vector<32x64xf32> to vector<32x16xf32>
    %cst_16 = arith.constant dense<0.000000e+00> : vector<32x32xf32>
    %53 = tpu.matmul %50, %51, %cst_16 {dimension_numbers = #tpu.dot_dimension_numbers<[1], [1], [0], [0], [0, 0, 1, 0], [], []>} : vector<32x16xf32>, vector<32x16xf32>, vector<32x32xf32> -> vector<32x32xf32>
    %cst_17 = arith.constant -1.000000e+30 : f32
    %54 = vector.broadcast %cst_17 : f32 to vector<32x32xf32>
    %55 = arith.select %6, %53, %54 : vector<32x32xi1>, vector<32x32xf32>
    %cst_18 = arith.constant dense<0xFF800000> : vector<32xf32>
    %56 = vector.multi_reduction <maximumf>, %55, %cst_18 [1] : vector<32x32xf32> to vector<32xf32>
    %57 = vector.shape_cast %56 : vector<32xf32> to vector<32x1xf32>
    %58 = vector.broadcast %57 : vector<32x1xf32> to vector<32x32xf32>
    %59 = arith.subf %55, %58 : vector<32x32xf32>
    %60 = math.exp %59 : vector<32x32xf32>
    %cst_19 = arith.constant dense<0.000000e+00> : vector<32xf32>
    %61 = vector.multi_reduction <add>, %60, %cst_19 [1] : vector<32x32xf32> to vector<32xf32>
    %62 = vector.shape_cast %61 : vector<32xf32> to vector<32x1xf32>
    %63 = tpu.reciprocal %62 {approx = true} : vector<32x1xf32> -> vector<32x1xf32>
    %64 = vector.broadcast %63 : vector<32x1xf32> to vector<32x32xf32>
    %65 = arith.mulf %60, %64 : vector<32x32xf32>
    %66 = arith.truncf %65 : vector<32x32xf32> to vector<32x32xbf16>
    %67 = arith.truncf %52 : vector<32x16xf32> to vector<32x16xbf16>
    %cst_20 = arith.constant dense<0.000000e+00> : vector<32x16xf32>
    %68 = tpu.matmul %66, %67, %cst_20 {dimension_numbers = #tpu.dot_dimension_numbers<[1], [0], [0], [1], [0, 0, 1, 1], [], []>} : vector<32x32xbf16>, vector<32x16xbf16>, vector<32x16xf32> -> vector<32x16xf32>
    %c0_21 = arith.constant 0 : index
    %c32 = arith.constant 32 : index
    %69 = vector.load %arg2[%c0_21, %c32] : memref<64x64xf32, #tpu.memory_space<vmem>>, vector<32x16xf32>
    tpu.vector_store %arg2[%c0_21, %c32], %68 {strides = array<i32>} : memref<64x64xf32, #tpu.memory_space<vmem>>, vector<32x16xf32>,
    %70 = vector.extract_strided_slice %7 {offsets = [0, 48], sizes = [32, 16], strides = [1, 1]} : vector<32x64xf32> to vector<32x16xf32>
    %71 = vector.extract_strided_slice %8 {offsets = [0, 48], sizes = [32, 16], strides = [1, 1]} : vector<32x64xf32> to vector<32x16xf32>
    %72 = vector.extract_strided_slice %9 {offsets = [0, 48], sizes = [32, 16], strides = [1, 1]} : vector<32x64xf32> to vector<32x16xf32>
    %cst_22 = arith.constant dense<0.000000e+00> : vector<32x32xf32>
    %73 = tpu.matmul %70, %71, %cst_22 {dimension_numbers = #tpu.dot_dimension_numbers<[1], [1], [0], [0], [0, 0, 1, 0], [], []>} : vector<32x16xf32>, vector<32x16xf32>, vector<32x32xf32> -> vector<32x32xf32>
    %cst_23 = arith.constant -1.000000e+30 : f32
    %74 = vector.broadcast %cst_23 : f32 to vector<32x32xf32>
    %75 = arith.select %6, %73, %74 : vector<32x32xi1>, vector<32x32xf32>
    %cst_24 = arith.constant dense<0xFF800000> : vector<32xf32>
    %76 = vector.multi_reduction <maximumf>, %75, %cst_24 [1] : vector<32x32xf32> to vector<32xf32>
    %77 = vector.shape_cast %76 : vector<32xf32> to vector<32x1xf32>
    %78 = vector.broadcast %77 : vector<32x1xf32> to vector<32x32xf32>
    %79 = arith.subf %75, %78 : vector<32x32xf32>
    %80 = math.exp %79 : vector<32x32xf32>
    %cst_25 = arith.constant dense<0.000000e+00> : vector<32xf32>
    %81 = vector.multi_reduction <add>, %80, %cst_25 [1] : vector<32x32xf32> to vector<32xf32>
    %82 = vector.shape_cast %81 : vector<32xf32> to vector<32x1xf32>
    %83 = tpu.reciprocal %82 {approx = true} : vector<32x1xf32> -> vector<32x1xf32>
    %84 = vector.broadcast %83 : vector<32x1xf32> to vector<32x32xf32>
    %85 = arith.mulf %80, %84 : vector<32x32xf32>
    %86 = arith.truncf %85 : vector<32x32xf32> to vector<32x32xbf16>
    %87 = arith.truncf %72 : vector<32x16xf32> to vector<32x16xbf16>
    %cst_26 = arith.constant dense<0.000000e+00> : vector<32x16xf32>
    %88 = tpu.matmul %86, %87, %cst_26 {dimension_numbers = #tpu.dot_dimension_numbers<[1], [0], [0], [1], [0, 0, 1, 1], [], []>} : vector<32x32xbf16>, vector<32x16xbf16>, vector<32x16xf32> -> vector<32x16xf32>
    %c0_27 = arith.constant 0 : index
    %c48 = arith.constant 48 : index
    %89 = vector.load %arg2[%c0_27, %c48] : memref<64x64xf32, #tpu.memory_space<vmem>>, vector<32x16xf32>
    tpu.vector_store %arg2[%c0_27, %c48], %88 {strides = array<i32>} : memref<64x64xf32, #tpu.memory_space<vmem>>, vector<32x16xf32>,
    %90 = vector.extract_strided_slice %3 {offsets = [32, 0], sizes = [32, 64], strides = [1, 1]} : vector<64x192xf32> to vector<32x64xf32>
    %91 = vector.extract_strided_slice %3 {offsets = [32, 64], sizes = [32, 64], strides = [1, 1]} : vector<64x192xf32> to vector<32x64xf32>
    %92 = vector.extract_strided_slice %3 {offsets = [32, 128], sizes = [32, 64], strides = [1, 1]} : vector<64x192xf32> to vector<32x64xf32>
    %93 = vector.extract_strided_slice %90 {offsets = [0, 0], sizes = [32, 16], strides = [1, 1]} : vector<32x64xf32> to vector<32x16xf32>
    %94 = vector.extract_strided_slice %91 {offsets = [0, 0], sizes = [32, 16], strides = [1, 1]} : vector<32x64xf32> to vector<32x16xf32>
    %95 = vector.extract_strided_slice %92 {offsets = [0, 0], sizes = [32, 16], strides = [1, 1]} : vector<32x64xf32> to vector<32x16xf32>
    %cst_28 = arith.constant dense<0.000000e+00> : vector<32x32xf32>
    %96 = tpu.matmul %93, %94, %cst_28 {dimension_numbers = #tpu.dot_dimension_numbers<[1], [1], [0], [0], [0, 0, 1, 0], [], []>} : vector<32x16xf32>, vector<32x16xf32>, vector<32x32xf32> -> vector<32x32xf32>
    %cst_29 = arith.constant -1.000000e+30 : f32
    %97 = vector.broadcast %cst_29 : f32 to vector<32x32xf32>
    %98 = arith.select %6, %96, %97 : vector<32x32xi1>, vector<32x32xf32>
    %cst_30 = arith.constant dense<0xFF800000> : vector<32xf32>
    %99 = vector.multi_reduction <maximumf>, %98, %cst_30 [1] : vector<32x32xf32> to vector<32xf32>
    %100 = vector.shape_cast %99 : vector<32xf32> to vector<32x1xf32>
    %101 = vector.broadcast %100 : vector<32x1xf32> to vector<32x32xf32>
    %102 = arith.subf %98, %101 : vector<32x32xf32>
    %103 = math.exp %102 : vector<32x32xf32>
    %cst_31 = arith.constant dense<0.000000e+00> : vector<32xf32>
    %104 = vector.multi_reduction <add>, %103, %cst_31 [1] : vector<32x32xf32> to vector<32xf32>
    %105 = vector.shape_cast %104 : vector<32xf32> to vector<32x1xf32>
    %106 = tpu.reciprocal %105 {approx = true} : vector<32x1xf32> -> vector<32x1xf32>
    %107 = vector.broadcast %106 : vector<32x1xf32> to vector<32x32xf32>
    %108 = arith.mulf %103, %107 : vector<32x32xf32>
    %109 = arith.truncf %108 : vector<32x32xf32> to vector<32x32xbf16>
    %110 = arith.truncf %95 : vector<32x16xf32> to vector<32x16xbf16>
    %cst_32 = arith.constant dense<0.000000e+00> : vector<32x16xf32>
    %111 = tpu.matmul %109, %110, %cst_32 {dimension_numbers = #tpu.dot_dimension_numbers<[1], [0], [0], [1], [0, 0, 1, 1], [], []>} : vector<32x32xbf16>, vector<32x16xbf16>, vector<32x16xf32> -> vector<32x16xf32>
    %c32_33 = arith.constant 32 : index
    %c0_34 = arith.constant 0 : index
    %112 = vector.load %arg2[%c32_33, %c0_34] : memref<64x64xf32, #tpu.memory_space<vmem>>, vector<32x16xf32>
    tpu.vector_store %arg2[%c32_33, %c0_34], %111 {strides = array<i32>} : memref<64x64xf32, #tpu.memory_space<vmem>>, vector<32x16xf32>,
    %113 = vector.extract_strided_slice %90 {offsets = [0, 16], sizes = [32, 16], strides = [1, 1]} : vector<32x64xf32> to vector<32x16xf32>
    %114 = vector.extract_strided_slice %91 {offsets = [0, 16], sizes = [32, 16], strides = [1, 1]} : vector<32x64xf32> to vector<32x16xf32>
    %115 = vector.extract_strided_slice %92 {offsets = [0, 16], sizes = [32, 16], strides = [1, 1]} : vector<32x64xf32> to vector<32x16xf32>
    %cst_35 = arith.constant dense<0.000000e+00> : vector<32x32xf32>
    %116 = tpu.matmul %113, %114, %cst_35 {dimension_numbers = #tpu.dot_dimension_numbers<[1], [1], [0], [0], [0, 0, 1, 0], [], []>} : vector<32x16xf32>, vector<32x16xf32>, vector<32x32xf32> -> vector<32x32xf32>
    %cst_36 = arith.constant -1.000000e+30 : f32
    %117 = vector.broadcast %cst_36 : f32 to vector<32x32xf32>
    %118 = arith.select %6, %116, %117 : vector<32x32xi1>, vector<32x32xf32>
    %cst_37 = arith.constant dense<0xFF800000> : vector<32xf32>
    %119 = vector.multi_reduction <maximumf>, %118, %cst_37 [1] : vector<32x32xf32> to vector<32xf32>
    %120 = vector.shape_cast %119 : vector<32xf32> to vector<32x1xf32>
    %121 = vector.broadcast %120 : vector<32x1xf32> to vector<32x32xf32>
    %122 = arith.subf %118, %121 : vector<32x32xf32>
    %123 = math.exp %122 : vector<32x32xf32>
    %cst_38 = arith.constant dense<0.000000e+00> : vector<32xf32>
    %124 = vector.multi_reduction <add>, %123, %cst_38 [1] : vector<32x32xf32> to vector<32xf32>
    %125 = vector.shape_cast %124 : vector<32xf32> to vector<32x1xf32>
    %126 = tpu.reciprocal %125 {approx = true} : vector<32x1xf32> -> vector<32x1xf32>
    %127 = vector.broadcast %126 : vector<32x1xf32> to vector<32x32xf32>
    %128 = arith.mulf %123, %127 : vector<32x32xf32>
    %129 = arith.truncf %128 : vector<32x32xf32> to vector<32x32xbf16>
    %130 = arith.truncf %115 : vector<32x16xf32> to vector<32x16xbf16>
    %cst_39 = arith.constant dense<0.000000e+00> : vector<32x16xf32>
    %131 = tpu.matmul %129, %130, %cst_39 {dimension_numbers = #tpu.dot_dimension_numbers<[1], [0], [0], [1], [0, 0, 1, 1], [], []>} : vector<32x32xbf16>, vector<32x16xbf16>, vector<32x16xf32> -> vector<32x16xf32>
    %c32_40 = arith.constant 32 : index
    %c16_41 = arith.constant 16 : index
    %132 = vector.load %arg2[%c32_40, %c16_41] : memref<64x64xf32, #tpu.memory_space<vmem>>, vector<32x16xf32>
    tpu.vector_store %arg2[%c32_40, %c16_41], %131 {strides = array<i32>} : memref<64x64xf32, #tpu.memory_space<vmem>>, vector<32x16xf32>,
    %133 = vector.extract_strided_slice %90 {offsets = [0, 32], sizes = [32, 16], strides = [1, 1]} : vector<32x64xf32> to vector<32x16xf32>
    %134 = vector.extract_strided_slice %91 {offsets = [0, 32], sizes = [32, 16], strides = [1, 1]} : vector<32x64xf32> to vector<32x16xf32>
    %135 = vector.extract_strided_slice %92 {offsets = [0, 32], sizes = [32, 16], strides = [1, 1]} : vector<32x64xf32> to vector<32x16xf32>
    %cst_42 = arith.constant dense<0.000000e+00> : vector<32x32xf32>
    %136 = tpu.matmul %133, %134, %cst_42 {dimension_numbers = #tpu.dot_dimension_numbers<[1], [1], [0], [0], [0, 0, 1, 0], [], []>} : vector<32x16xf32>, vector<32x16xf32>, vector<32x32xf32> -> vector<32x32xf32>
    %cst_43 = arith.constant -1.000000e+30 : f32
    %137 = vector.broadcast %cst_43 : f32 to vector<32x32xf32>
    %138 = arith.select %6, %136, %137 : vector<32x32xi1>, vector<32x32xf32>
    %cst_44 = arith.constant dense<0xFF800000> : vector<32xf32>
    %139 = vector.multi_reduction <maximumf>, %138, %cst_44 [1] : vector<32x32xf32> to vector<32xf32>
    %140 = vector.shape_cast %139 : vector<32xf32> to vector<32x1xf32>
    %141 = vector.broadcast %140 : vector<32x1xf32> to vector<32x32xf32>
    %142 = arith.subf %138, %141 : vector<32x32xf32>
    %143 = math.exp %142 : vector<32x32xf32>
    %cst_45 = arith.constant dense<0.000000e+00> : vector<32xf32>
    %144 = vector.multi_reduction <add>, %143, %cst_45 [1] : vector<32x32xf32> to vector<32xf32>
    %145 = vector.shape_cast %144 : vector<32xf32> to vector<32x1xf32>
    %146 = tpu.reciprocal %145 {approx = true} : vector<32x1xf32> -> vector<32x1xf32>
    %147 = vector.broadcast %146 : vector<32x1xf32> to vector<32x32xf32>
    %148 = arith.mulf %143, %147 : vector<32x32xf32>
    %149 = arith.truncf %148 : vector<32x32xf32> to vector<32x32xbf16>
    %150 = arith.truncf %135 : vector<32x16xf32> to vector<32x16xbf16>
    %cst_46 = arith.constant dense<0.000000e+00> : vector<32x16xf32>
    %151 = tpu.matmul %149, %150, %cst_46 {dimension_numbers = #tpu.dot_dimension_numbers<[1], [0], [0], [1], [0, 0, 1, 1], [], []>} : vector<32x32xbf16>, vector<32x16xbf16>, vector<32x16xf32> -> vector<32x16xf32>
    %c32_47 = arith.constant 32 : index
    %c32_48 = arith.constant 32 : index
    %152 = vector.load %arg2[%c32_47, %c32_48] : memref<64x64xf32, #tpu.memory_space<vmem>>, vector<32x16xf32>
    tpu.vector_store %arg2[%c32_47, %c32_48], %151 {strides = array<i32>} : memref<64x64xf32, #tpu.memory_space<vmem>>, vector<32x16xf32>,
    %153 = vector.extract_strided_slice %90 {offsets = [0, 48], sizes = [32, 16], strides = [1, 1]} : vector<32x64xf32> to vector<32x16xf32>
    %154 = vector.extract_strided_slice %91 {offsets = [0, 48], sizes = [32, 16], strides = [1, 1]} : vector<32x64xf32> to vector<32x16xf32>
    %155 = vector.extract_strided_slice %92 {offsets = [0, 48], sizes = [32, 16], strides = [1, 1]} : vector<32x64xf32> to vector<32x16xf32>
    %cst_49 = arith.constant dense<0.000000e+00> : vector<32x32xf32>
    %156 = tpu.matmul %153, %154, %cst_49 {dimension_numbers = #tpu.dot_dimension_numbers<[1], [1], [0], [0], [0, 0, 1, 0], [], []>} : vector<32x16xf32>, vector<32x16xf32>, vector<32x32xf32> -> vector<32x32xf32>
    %cst_50 = arith.constant -1.000000e+30 : f32
    %157 = vector.broadcast %cst_50 : f32 to vector<32x32xf32>
    %158 = arith.select %6, %156, %157 : vector<32x32xi1>, vector<32x32xf32>
    %cst_51 = arith.constant dense<0xFF800000> : vector<32xf32>
    %159 = vector.multi_reduction <maximumf>, %158, %cst_51 [1] : vector<32x32xf32> to vector<32xf32>
    %160 = vector.shape_cast %159 : vector<32xf32> to vector<32x1xf32>
    %161 = vector.broadcast %160 : vector<32x1xf32> to vector<32x32xf32>
    %162 = arith.subf %158, %161 : vector<32x32xf32>
    %163 = math.exp %162 : vector<32x32xf32>
    %cst_52 = arith.constant dense<0.000000e+00> : vector<32xf32>
    %164 = vector.multi_reduction <add>, %163, %cst_52 [1] : vector<32x32xf32> to vector<32xf32>
    %165 = vector.shape_cast %164 : vector<32xf32> to vector<32x1xf32>
    %166 = tpu.reciprocal %165 {approx = true} : vector<32x1xf32> -> vector<32x1xf32>
    %167 = vector.broadcast %166 : vector<32x1xf32> to vector<32x32xf32>
    %168 = arith.mulf %163, %167 : vector<32x32xf32>
    %169 = arith.truncf %168 : vector<32x32xf32> to vector<32x32xbf16>
    %170 = arith.truncf %155 : vector<32x16xf32> to vector<32x16xbf16>
    %cst_53 = arith.constant dense<0.000000e+00> : vector<32x16xf32>
    %171 = tpu.matmul %169, %170, %cst_53 {dimension_numbers = #tpu.dot_dimension_numbers<[1], [0], [0], [1], [0, 0, 1, 1], [], []>} : vector<32x32xbf16>, vector<32x16xbf16>, vector<32x16xf32> -> vector<32x16xf32>
    %c32_54 = arith.constant 32 : index
    %c48_55 = arith.constant 48 : index
    %172 = vector.load %arg2[%c32_54, %c48_55] : memref<64x64xf32, #tpu.memory_space<vmem>>, vector<32x16xf32>
    tpu.vector_store %arg2[%c32_54, %c48_55], %171 {strides = array<i32>} : memref<64x64xf32, #tpu.memory_space<vmem>>, vector<32x16xf32>,
    return
  }
}

</mosaic_0001>

<llo_original>
// kernel: tpu_custom_call.1
$region0: #{tpu_custom_call.1}
  #allocation0 [shape = 'u32[]', space=smem, size = 0x4, offset = 0x4, fixed_abs, tag = 'smem constant byte address 0x4 - core index']
  #allocation1 [shape = 'u32[144,128]{1,0:T(1,128)}', space=vmem, size = 0x12000, scoped, tag = 'internal scratch']
  %s0 = inlined_call_operand.vmem [shape: f32[64,128], index: 0, kind: input, shape index: {}]
  %s1 = inlined_call_operand.vmem [shape: bf16[128,192], index: 1, kind: input, shape index: {}]
  %s2 = inlined_call_operand.hbm [shape: f32[64,64], index: 2, kind: output, shape index: {}]
  %s3 = sld [smem:[#allocation0]]
  $region18: #{tpu_custom_call.1} parent=0
    _
  %s5 = ssub.s32 1, %s3
  %s6 = scalar_select 0, %s5, %s3
  $region1: #{tpu_custom_call.1} parent=0
    #allocation2 [shape = 'u8[32768]{0}', space=vmem, size = 0x8000, scoped, tag = 'output window, operand 0, single buffered']
    #allocation3 [shape = 's32[1]{0}', space=sflag, size = 0x4, scoped, tag = 'scoped memory for tpu_custom_call.1']
    %7 = vsyncpa [#allocation3], 0
    // Predicated region
    $region2: #{tpu_custom_call.1} parent=1 // pred_check
      _
    $region3: #{tpu_custom_call.1} parent=1 // pred_check_branch
      %9 = sbr.rel (0) target = $region5
    $region4: #{tpu_custom_call.1} parent=1 // pred_region
      _
    $region5: #{tpu_custom_call.1} parent=1 // pred_fallthru
      _
    // Predicated region
    $region6: #{tpu_custom_call.1} parent=1 // pred_check
      _
    $region7: #{tpu_custom_call.1} parent=1 // pred_check_branch
      %11 = sbr.rel (0) target = $region9
    $region8: #{tpu_custom_call.1} parent=1 // pred_region
      _
    $region9: #{tpu_custom_call.1} parent=1 // pred_fallthru
      _
    %v13 = vld [vmem:[%s0] sm:$0xff]
    %v14 = vld [vmem:[%s0 + $0x8] sm:$0xff]
    %v15 = vld [vmem:[%s0 + $0x10] sm:$0xff]
    %v16 = vld [vmem:[%s0 + $0x18] sm:$0xff]
    %v17 = vld [vmem:[%s0 + $0x20] sm:$0xff]
    %v18 = vld [vmem:[%s0 + $0x28] sm:$0xff]
    %v19 = vld [vmem:[%s0 + $0x30] sm:$0xff]
    %v20 = vld [vmem:[%s0 + $0x38] sm:$0xff]
    %v21 = vpack.c.bf16 %v14, %v13
    %v22 = vpack.c.bf16 %v16, %v15
    %v23 = vpack.c.bf16 %v18, %v17
    %v24 = vpack.c.bf16 %v20, %v19
    %v25 = vld [vmem:[%s1] sm:$0xff]
    %v26 = vld [vmem:[%s1 + $0x8] sm:$0xff]
    %v27 = vld [vmem:[%s1 + $0x10] sm:$0xff]
    %v28 = vld [vmem:[%s1 + $0x18] sm:$0xff]
    %v29 = vld [vmem:[%s1 + $0x20] sm:$0xff]
    %v30 = vld [vmem:[%s1 + $0x28] sm:$0xff]
    %v31 = vld [vmem:[%s1 + $0x30] sm:$0xff]
    %v32 = vld [vmem:[%s1 + $0x38] sm:$0xff]
    %v33 = vld [vmem:[%s1 + $0x40] sm:$0xff]
    %v34 = vld [vmem:[%s1 + $0x48] sm:$0xff]
    %v35 = vld [vmem:[%s1 + $0x50] sm:$0xff]
    %v36 = vld [vmem:[%s1 + $0x58] sm:$0xff]
    %v37 = vld [vmem:[%s1 + $0x60] sm:$0xff]
    %v38 = vld [vmem:[%s1 + $0x68] sm:$0xff]
    %v39 = vld [vmem:[%s1 + $0x70] sm:$0xff]
    %v40 = vld [vmem:[%s1 + $0x78] sm:$0xff]
    %v57 = vunpack.c.l.b16 %v25
    %v58 = vunpack.c.h.b16 %v25
    %v59 = vunpack.c.l.b16 %v26
    %v60 = vunpack.c.h.b16 %v26
    %v61 = vunpack.c.l.b16 %v27
    %v62 = vunpack.c.h.b16 %v27
    %v63 = vunpack.c.l.b16 %v28
    %v64 = vunpack.c.h.b16 %v28
    %v65 = vunpack.c.l.b16 %v29
    %v66 = vunpack.c.h.b16 %v29
    %v67 = vunpack.c.l.b16 %v30
    %v68 = vunpack.c.h.b16 %v30
    %v69 = vunpack.c.l.b16 %v31
    %v70 = vunpack.c.h.b16 %v31
    %v71 = vunpack.c.l.b16 %v32
    %v72 = vunpack.c.h.b16 %v32
    %v73 = vunpack.c.l.b16 %v33
    %v74 = vunpack.c.h.b16 %v33
    %v75 = vunpack.c.l.b16 %v34
    %v76 = vunpack.c.h.b16 %v34
    %v77 = vunpack.c.l.b16 %v35
    %v78 = vunpack.c.h.b16 %v35
    %v79 = vunpack.c.l.b16 %v36
    %v80 = vunpack.c.h.b16 %v36
    %v81 = vunpack.c.l.b16 %v37
    %v82 = vunpack.c.h.b16 %v37
    %v83 = vunpack.c.l.b16 %v38
    %v84 = vunpack.c.h.b16 %v38
    %v85 = vunpack.c.l.b16 %v39
    %v86 = vunpack.c.h.b16 %v39
    %v87 = vunpack.c.l.b16 %v40
    %v88 = vunpack.c.h.b16 %v40
    %v89 = vpack.c.b16 %v59, %v57
    %v90 = vpack.c.b16 %v60, %v58
    %v91 = vpack.c.b16 %v63, %v61
    %v92 = vpack.c.b16 %v64, %v62
    %v93 = vpack.c.b16 %v67, %v65
    %v94 = vpack.c.b16 %v68, %v66
    %v95 = vpack.c.b16 %v71, %v69
    %v96 = vpack.c.b16 %v72, %v70
    %v97 = vpack.c.b16 %v75, %v73
    %v98 = vpack.c.b16 %v76, %v74
    %v99 = vpack.c.b16 %v79, %v77
    %v100 = vpack.c.b16 %v80, %v78
    %v101 = vpack.c.b16 %v83, %v81
    %v102 = vpack.c.b16 %v84, %v82
    %v103 = vpack.c.b16 %v87, %v85
    %v104 = vpack.c.b16 %v88, %v86
    %121 = vmatprep.subr.bf16.mxu0 %v90
    %122 = vmatpush1.bf16.msra.mxu0 %v89
    %123 = vmatprep.subr.bf16.mxu0 %v92
    %124 = vmatpush1.bf16.msra.mxu0 %v91
    %125 = vmatprep.subr.bf16.mxu0 %v94
    %126 = vmatpush1.bf16.msra.mxu0 %v93
    %127 = vmatprep.subr.bf16.mxu0 %v96
    %128 = vmatpush1.bf16.msra.mxu0 %v95
    %129 = vmatprep.subr.bf16.mxu0 %v98
    %130 = vmatpush1.bf16.msra.mxu0 %v97
    %131 = vmatprep.subr.bf16.mxu0 %v100
    %132 = vmatpush1.bf16.msra.mxu0 %v99
    %133 = vmatprep.subr.bf16.mxu0 %v102
    %134 = vmatpush1.bf16.msra.mxu0 %v101
    %135 = vmatprep.subr.bf16.mxu0 %v104
    %136 = vmatpush1.bf16.msra.mxu0 %v103
    %137 = vmatprep.subr.bf16.mxu0 0
    %138 = vmatpush1.bf16.msra.mxu0 0
    %139 = vmatprep.subr.bf16.mxu0 0
    %140 = vmatpush1.bf16.msra.mxu0 0
    %141 = vmatprep.subr.bf16.mxu0 0
    %142 = vmatpush1.bf16.msra.mxu0 0
    %143 = vmatprep.subr.bf16.mxu0 0
    %144 = vmatpush1.bf16.msra.mxu0 0
    %145 = vmatprep.subr.bf16.mxu0 0
    %146 = vmatpush1.bf16.msra.mxu0 0
    %147 = vmatprep.subr.bf16.mxu0 0
    %148 = vmatpush1.bf16.msra.mxu0 0
    %149 = vmatprep.subr.bf16.mxu0 0
    %150 = vmatpush1.bf16.msra.mxu0 0
    %151 = vmatprep.subr.bf16.mxu0 0
    %152 = vmatpush1.bf16.msra.mxu0 0
    %153 = vmatprep.mubr.bf16.mxu0 0
    %154 = vmatmul.mubr.bf16.gmra.mrb[0].mxu0 %v21
    %v155 = vpop.f32.mrb[0].mxu0
    %v156 = vadd.f32 0.0, %v155
    %v157 = vpop.f32.mrb[0].mxu0
    %v158 = vadd.f32 0.0, %v157
    %v159 = vpop.f32.mrb[0].mxu0
    %v160 = vadd.f32 0.0, %v159
    %v161 = vpop.f32.mrb[0].mxu0
    %v162 = vadd.f32 0.0, %v161
    %163 = vmatprep.mubr.bf16.mxu0 0
    %164 = vmatmul.mubr.bf16.gmra.mrb[0].mxu0 %v22
    %v165 = vpop.f32.mrb[0].mxu0
    %v166 = vadd.f32 0.0, %v165
    %v167 = vpop.f32.mrb[0].mxu0
    %v168 = vadd.f32 0.0, %v167
    %v169 = vpop.f32.mrb[0].mxu0
    %v170 = vadd.f32 0.0, %v169
    %v171 = vpop.f32.mrb[0].mxu0
    %v172 = vadd.f32 0.0, %v171
    %173 = vmatprep.mubr.bf16.mxu0 0
    %174 = vmatmul.mubr.bf16.gmra.mrb[0].mxu0 %v23
    %v175 = vpop.f32.mrb[0].mxu0
    %v176 = vadd.f32 0.0, %v175
    %v177 = vpop.f32.mrb[0].mxu0
    %v178 = vadd.f32 0.0, %v177
    %v179 = vpop.f32.mrb[0].mxu0
    %v180 = vadd.f32 0.0, %v179
    %v181 = vpop.f32.mrb[0].mxu0
    %v182 = vadd.f32 0.0, %v181
    %183 = vmatprep.mubr.bf16.mxu0 0
    %184 = vmatmul.mubr.bf16.gmra.mrb[0].mxu0 %v24
    %v185 = vpop.f32.mrb[0].mxu0
    %v186 = vadd.f32 0.0, %v185
    %v187 = vpop.f32.mrb[0].mxu0
    %v188 = vadd.f32 0.0, %v187
    %v189 = vpop.f32.mrb[0].mxu0
    %v190 = vadd.f32 0.0, %v189
    %v191 = vpop.f32.mrb[0].mxu0
    %v192 = vadd.f32 0.0, %v191
    %193 = vdwg.mxu0
    %v194 = vlaneseq
    %v195 = vshrl.u32 %v194, 7
    %v196 = vadd.s32 %v195, 8
    %v197 = vadd.s32 %v195, 16
    %v198 = vadd.s32 %v195, 24
    %v199 = vlaneseq
    %v200 = vand.u32 %v199, 127
    %vm201 = vcmp.ge.s32.totalorder %v195, %v200
    %vm202 = vcmp.ge.s32.totalorder %v196, %v200
    %vm203 = vcmp.ge.s32.totalorder %v197, %v200
    %vm204 = vcmp.ge.s32.totalorder %v198, %v200
    %209 = vrot.lane.b32.xlu0 %v156, 64
    %v210 = vpop.permute.xlu0 %209
    %211 = vrot.lane.b32.xlu0 %v160, 64
    %v212 = vpop.permute.xlu0 %211
    %213 = vrot.lane.b32.xlu0 %v166, 64
    %v214 = vpop.permute.xlu0 %213
    %215 = vrot.lane.b32.xlu0 %v170, 64
    %v216 = vpop.permute.xlu0 %215
    %vm217 = vcmask 130048
    %v218 = vsel %vm217, %v156, 0
    %v220 = vsel %vm217, %v160, 0
    %v222 = vsel %vm217, %v166, 0
    %v224 = vsel %vm217, %v170, 0
    %v226 = vsel %vm217, %v210, 0
    %v228 = vsel %vm217, %v212, 0
    %v230 = vsel %vm217, %v214, 0
    %v232 = vsel %vm217, %v216, 0
    %234 = vmatprep.subr.mxu0 0.0
    %235 = vmatpush1.xpose.msra.mxu0 %v226
    %236 = vmatprep.subr.mxu0 0.0
    %237 = vmatpush1.xpose.msra.mxu0 %v228
    %238 = vmatprep.subr.mxu0 0.0
    %239 = vmatpush1.xpose.msra.mxu0 %v230
    %240 = vmatprep.subr.mxu0 0.0
    %241 = vmatpush1.xpose.msra.mxu0 %v232
    %242 = vmatprep.subr.mxu0 0.0
    %243 = vmatpush1.xpose.msra.mxu0 0.0
    %244 = vmatprep.subr.mxu0 0.0
    %245 = vmatpush1.xpose.msra.mxu0 0.0
    %246 = vmatprep.subr.mxu0 0.0
    %247 = vmatpush1.xpose.msra.mxu0 0.0
    %248 = vmatprep.subr.mxu0 0.0
    %249 = vmatpush1.xpose.msra.mxu0 0.0
    %250 = vmatprep.subr.mxu0 0.0
    %251 = vmatpush1.xpose.msra.mxu0 0.0
    %252 = vmatprep.subr.mxu0 0.0
    %253 = vmatpush1.xpose.msra.mxu0 0.0
    %254 = vmatprep.subr.mxu0 0.0
    %255 = vmatpush1.xpose.msra.mxu0 0.0
    %256 = vmatprep.subr.mxu0 0.0
    %257 = vmatpush1.xpose.msra.mxu0 0.0
    %258 = vmatprep.subr.mxu0 0.0
    %259 = vmatpush1.xpose.msra.mxu0 0.0
    %260 = vmatprep.subr.mxu0 0.0
    %261 = vmatpush1.xpose.msra.mxu0 0.0
    %262 = vmatprep.subr.mxu0 0.0
    %263 = vmatpush1.xpose.msra.mxu0 0.0
    %264 = vmatprep.subr.mxu0 0.0
    %265 = vmatpush1.xpose.msra.mxu0 0.0
    %266 = vmatprep.subr.mxu0 0.0
    %267 = vmatpush1.xpose.msra.mxu0 0.0
    %268 = vmatprep.subr.mxu0 0.0
    %269 = vmatpush1.xpose.msra.mxu0 0.0
    %270 = vmatprep.subr.mxu0 0.0
    %271 = vmatpush1.xpose.msra.mxu0 0.0
    %272 = vmatprep.subr.mxu0 0.0
    %273 = vmatpush1.xpose.msra.mxu0 0.0
    %274 = vmatprep.subr.mxu0 0.0
    %275 = vmatpush1.xpose.msra.mxu0 0.0
    %276 = vmatprep.subr.mxu0 0.0
    %277 = vmatpush1.xpose.msra.mxu0 0.0
    %278 = vmatprep.subr.mxu0 0.0
    %279 = vmatpush1.xpose.msra.mxu0 0.0
    %280 = vmatprep.subr.mxu0 0.0
    %281 = vmatpush1.xpose.msra.mxu0 0.0
    %282 = vmatprep.subr.mxu0 0.0
    %283 = vmatpush1.xpose.msra.mxu0 0.0
    %284 = vmatprep.subr.mxu0 0.0
    %285 = vmatpush1.xpose.msra.mxu0 0.0
    %286 = vmatprep.subr.mxu0 0.0
    %287 = vmatpush1.xpose.msra.mxu0 0.0
    %288 = vmatprep.subr.mxu0 0.0
    %289 = vmatpush1.xpose.msra.mxu0 0.0
    %290 = vmatprep.subr.mxu0 0.0
    %291 = vmatpush1.xpose.msra.mxu0 0.0
    %292 = vmatprep.subr.mxu0 0.0
    %293 = vmatpush1.xpose.msra.mxu0 0.0
    %294 = vmatprep.subr.mxu0 0.0
    %295 = vmatpush1.xpose.msra.mxu0 0.0
    %296 = vmatprep.subr.mxu0 0.0
    %297 = vmatpush1.xpose.msra.mxu0 0.0
    %298 = vmatprep.mubr.f32.mxu0 0.0
    %299 = vmatmul.mubr.f32.gmra.mrb[0].mxu0 %v218
    %v300 = vpop.f32.mrb[0].mxu0
    %v301 = vadd.f32 0.0, %v300
    %v302 = vpop.f32.mrb[0].mxu0
    %303 = vmatprep.mubr.f32.mxu0 0.0
    %304 = vmatmul.mubr.f32.gmra.mrb[0].mxu0 %v220
    %v305 = vpop.f32.mrb[0].mxu0
    %v306 = vadd.f32 0.0, %v305
    %v307 = vpop.f32.mrb[0].mxu0
    %308 = vmatprep.mubr.f32.mxu0 0.0
    %309 = vmatmul.mubr.f32.gmra.mrb[0].mxu0 %v222
    %v310 = vpop.f32.mrb[0].mxu0
    %v311 = vadd.f32 0.0, %v310
    %v312 = vpop.f32.mrb[0].mxu0
    %313 = vmatprep.mubr.f32.mxu0 0.0
    %314 = vmatmul.mubr.f32.gmra.mrb[0].mxu0 %v224
    %v315 = vpop.f32.mrb[0].mxu0
    %v316 = vadd.f32 0.0, %v315
    %v317 = vpop.f32.mrb[0].mxu0
    %318 = vdwg.mxu0
    %v319 = vsel %vm201, %v301, -1e+30
    %v320 = vsel %vm202, %v306, -1e+30
    %v321 = vsel %vm203, %v311, -1e+30
    %v322 = vsel %vm204, %v316, -1e+30
    %vm323 = vcmask 261120
    %v324 = vsel %vm323, %v319, -inf
    %325 = vmax.xlane.f32.xlu0 %v324
    %v326 = vpop.xlane.xlu0 %325
    %v327 = vsel %vm323, %v320, -inf
    %328 = vmax.xlane.f32.xlu0 %v327
    %v329 = vpop.xlane.xlu0 %328
    %v330 = vsel %vm323, %v321, -inf
    %331 = vmax.xlane.f32.xlu0 %v330
    %v332 = vpop.xlane.xlu0 %331
    %v333 = vsel %vm323, %v322, -inf
    %334 = vmax.xlane.f32.xlu0 %v333
    %v335 = vpop.xlane.xlu0 %334
    %v336 = vsub.f32 %v319, %v326
    %v337 = vsub.f32 %v320, %v329
    %v338 = vsub.f32 %v321, %v332
    %v339 = vsub.f32 %v322, %v335
    %v340 = vmul.f32 %v336, 1.442695
    %v341 = vpow.pop %v340
    %v342 = vmul.f32 %v337, 1.442695
    %v343 = vpow.pop %v342
    %v344 = vmul.f32 %v338, 1.442695
    %v345 = vpow.pop %v344
    %v346 = vmul.f32 %v339, 1.442695
    %v347 = vpow.pop %v346
    %v348 = vsel %vm323, %v341, 0.0
    %349 = vadd.xlane.f32.xlu0 %v348
    %v350 = vpop.xlane.xlu0 %349
    %v351 = vsel %vm323, %v343, 0.0
    %352 = vadd.xlane.f32.xlu0 %v351
    %v353 = vpop.xlane.xlu0 %352
    %v354 = vsel %vm323, %v345, 0.0
    %355 = vadd.xlane.f32.xlu0 %v354
    %v356 = vpop.xlane.xlu0 %355
    %v357 = vsel %vm323, %v347, 0.0
    %358 = vadd.xlane.f32.xlu0 %v357
    %v359 = vpop.xlane.xlu0 %358
    %v360 = vrcp.pop %v350
    %v361 = vrcp.pop %v353
    %v362 = vrcp.pop %v356
    %v363 = vrcp.pop %v359
    %v364 = vmul.f32 %v341, %v360
    %v365 = vmul.f32 %v343, %v361
    %v366 = vmul.f32 %v345, %v362
    %v367 = vmul.f32 %v347, %v363
    %v368 = vpack.c.bf16 %v365, %v364
    %v369 = vpack.c.bf16 %v367, %v366
    %v370 = vpack.c.bf16 %v162, %v158
    %v371 = vpack.c.bf16 %v172, %v168
    %v373 = vsel %vm323, %v368, 0
    %v376 = vsel %vm323, %v369, 0
    %378 = vmatprep.subr.bf16.mxu0 0
    %379 = vmatpush1.bf16.msra.mxu0 %v370
    %380 = vmatprep.subr.bf16.mxu0 0
    %381 = vmatpush1.bf16.msra.mxu0 %v371
    %382 = vmatprep.subr.bf16.mxu0 0
    %383 = vmatpush1.bf16.msra.mxu0 0
    %384 = vmatprep.subr.bf16.mxu0 0
    %385 = vmatpush1.bf16.msra.mxu0 0
    %386 = vmatprep.subr.bf16.mxu0 0
    %387 = vmatpush1.bf16.msra.mxu0 0
    %388 = vmatprep.subr.bf16.mxu0 0
    %389 = vmatpush1.bf16.msra.mxu0 0
    %390 = vmatprep.subr.bf16.mxu0 0
    %391 = vmatpush1.bf16.msra.mxu0 0
    %392 = vmatprep.subr.bf16.mxu0 0
    %393 = vmatpush1.bf16.msra.mxu0 0
    %394 = vmatprep.subr.bf16.mxu0 0
    %395 = vmatpush1.bf16.msra.mxu0 0
    %396 = vmatprep.subr.bf16.mxu0 0
    %397 = vmatpush1.bf16.msra.mxu0 0
    %398 = vmatprep.subr.bf16.mxu0 0
    %399 = vmatpush1.bf16.msra.mxu0 0
    %400 = vmatprep.subr.bf16.mxu0 0
    %401 = vmatpush1.bf16.msra.mxu0 0
    %402 = vmatprep.subr.bf16.mxu0 0
    %403 = vmatpush1.bf16.msra.mxu0 0
    %404 = vmatprep.subr.bf16.mxu0 0
    %405 = vmatpush1.bf16.msra.mxu0 0
    %406 = vmatprep.subr.bf16.mxu0 0
    %407 = vmatpush1.bf16.msra.mxu0 0
    %408 = vmatprep.subr.bf16.mxu0 0
    %409 = vmatpush1.bf16.msra.mxu0 0
    %410 = vmatprep.mubr.bf16.mxu0 0
    %411 = vmatmul.mubr.bf16.gmra.mrb[0].mxu0 %v373
    %v412 = vpop.f32.mrb[0].mxu0
    %v413 = vadd.f32 0.0, %v412
    %v414 = vpop.f32.mrb[0].mxu0
    %v415 = vpop.f32.mrb[0].mxu0
    %v416 = vadd.f32 0.0, %v415
    %v417 = vpop.f32.mrb[0].mxu0
    %418 = vmatprep.mubr.bf16.mxu0 0
    %419 = vmatmul.mubr.bf16.gmra.mrb[0].mxu0 %v376
    %v420 = vpop.f32.mrb[0].mxu0
    %v421 = vadd.f32 0.0, %v420
    %v422 = vpop.f32.mrb[0].mxu0
    %v423 = vpop.f32.mrb[0].mxu0
    %v424 = vadd.f32 0.0, %v423
    %v425 = vpop.f32.mrb[0].mxu0
    %426 = vdwg.mxu0
    %427 = vst.msk [vmem:[#allocation2] sm:$0xff] %vm217, %v413
    %428 = vst.msk [vmem:[#allocation2 + $0x8] sm:$0xff] %vm217, %v416
    %429 = vst.msk [vmem:[#allocation2 + $0x10] sm:$0xff] %vm217, %v421
    %430 = vst.msk [vmem:[#allocation2 + $0x18] sm:$0xff] %vm217, %v424
    %431 = vrot.lane.b32.xlu0 %v156, 112
    %v432 = vpop.permute.xlu0 %431
    %433 = vrot.lane.b32.xlu0 %v160, 112
    %v434 = vpop.permute.xlu0 %433
    %435 = vrot.lane.b32.xlu0 %v166, 112
    %v436 = vpop.permute.xlu0 %435
    %437 = vrot.lane.b32.xlu0 %v170, 112
    %v438 = vpop.permute.xlu0 %437
    %439 = vrot.lane.b32.xlu0 %v156, 48
    %v440 = vpop.permute.xlu0 %439
    %441 = vrot.lane.b32.xlu0 %v160, 48
    %v442 = vpop.permute.xlu0 %441
    %443 = vrot.lane.b32.xlu0 %v166, 48
    %v444 = vpop.permute.xlu0 %443
    %445 = vrot.lane.b32.xlu0 %v170, 48
    %v446 = vpop.permute.xlu0 %445
    %v447 = vsel %vm217, %v432, 0
    %v449 = vsel %vm217, %v434, 0
    %v451 = vsel %vm217, %v436, 0
    %v453 = vsel %vm217, %v438, 0
    %v455 = vsel %vm217, %v440, 0
    %v457 = vsel %vm217, %v442, 0
    %v459 = vsel %vm217, %v444, 0
    %v461 = vsel %vm217, %v446, 0
    %463 = vmatprep.subr.mxu0 0.0
    %464 = vmatpush1.xpose.msra.mxu0 %v455
    %465 = vmatprep.subr.mxu0 0.0
    %466 = vmatpush1.xpose.msra.mxu0 %v457
    %467 = vmatprep.subr.mxu0 0.0
    %468 = vmatpush1.xpose.msra.mxu0 %v459
    %469 = vmatprep.subr.mxu0 0.0
    %470 = vmatpush1.xpose.msra.mxu0 %v461
    %471 = vmatprep.subr.mxu0 0.0
    %472 = vmatpush1.xpose.msra.mxu0 0.0
    %473 = vmatprep.subr.mxu0 0.0
    %474 = vmatpush1.xpose.msra.mxu0 0.0
    %475 = vmatprep.subr.mxu0 0.0
    %476 = vmatpush1.xpose.msra.mxu0 0.0
    %477 = vmatprep.subr.mxu0 0.0
    %478 = vmatpush1.xpose.msra.mxu0 0.0
    %479 = vmatprep.subr.mxu0 0.0
    %480 = vmatpush1.xpose.msra.mxu0 0.0
    %481 = vmatprep.subr.mxu0 0.0
    %482 = vmatpush1.xpose.msra.mxu0 0.0
    %483 = vmatprep.subr.mxu0 0.0
    %484 = vmatpush1.xpose.msra.mxu0 0.0
    %485 = vmatprep.subr.mxu0 0.0
    %486 = vmatpush1.xpose.msra.mxu0 0.0
    %487 = vmatprep.subr.mxu0 0.0
    %488 = vmatpush1.xpose.msra.mxu0 0.0
    %489 = vmatprep.subr.mxu0 0.0
    %490 = vmatpush1.xpose.msra.mxu0 0.0
    %491 = vmatprep.subr.mxu0 0.0
    %492 = vmatpush1.xpose.msra.mxu0 0.0
    %493 = vmatprep.subr.mxu0 0.0
    %494 = vmatpush1.xpose.msra.mxu0 0.0
    %495 = vmatprep.subr.mxu0 0.0
    %496 = vmatpush1.xpose.msra.mxu0 0.0
    %497 = vmatprep.subr.mxu0 0.0
    %498 = vmatpush1.xpose.msra.mxu0 0.0
    %499 = vmatprep.subr.mxu0 0.0
    %500 = vmatpush1.xpose.msra.mxu0 0.0
    %501 = vmatprep.subr.mxu0 0.0
    %502 = vmatpush1.xpose.msra.mxu0 0.0
    %503 = vmatprep.subr.mxu0 0.0
    %504 = vmatpush1.xpose.msra.mxu0 0.0
    %505 = vmatprep.subr.mxu0 0.0
    %506 = vmatpush1.xpose.msra.mxu0 0.0
    %507 = vmatprep.subr.mxu0 0.0
    %508 = vmatpush1.xpose.msra.mxu0 0.0
    %509 = vmatprep.subr.mxu0 0.0
    %510 = vmatpush1.xpose.msra.mxu0 0.0
    %511 = vmatprep.subr.mxu0 0.0
    %512 = vmatpush1.xpose.msra.mxu0 0.0
    %513 = vmatprep.subr.mxu0 0.0
    %514 = vmatpush1.xpose.msra.mxu0 0.0
    %515 = vmatprep.subr.mxu0 0.0
    %516 = vmatpush1.xpose.msra.mxu0 0.0
    %517 = vmatprep.subr.mxu0 0.0
    %518 = vmatpush1.xpose.msra.mxu0 0.0
    %519 = vmatprep.subr.mxu0 0.0
    %520 = vmatpush1.xpose.msra.mxu0 0.0
    %521 = vmatprep.subr.mxu0 0.0
    %522 = vmatpush1.xpose.msra.mxu0 0.0
    %523 = vmatprep.subr.mxu0 0.0
    %524 = vmatpush1.xpose.msra.mxu0 0.0
    %525 = vmatprep.subr.mxu0 0.0
    %526 = vmatpush1.xpose.msra.mxu0 0.0
    %527 = vmatprep.mubr.f32.mxu0 0.0
    %528 = vmatmul.mubr.f32.gmra.mrb[0].mxu0 %v447
    %v529 = vpop.f32.mrb[0].mxu0
    %v530 = vadd.f32 0.0, %v529
    %v531 = vpop.f32.mrb[0].mxu0
    %532 = vmatprep.mubr.f32.mxu0 0.0
    %533 = vmatmul.mubr.f32.gmra.mrb[0].mxu0 %v449
    %v534 = vpop.f32.mrb[0].mxu0
    %v535 = vadd.f32 0.0, %v534
    %v536 = vpop.f32.mrb[0].mxu0
    %537 = vmatprep.mubr.f32.mxu0 0.0
    %538 = vmatmul.mubr.f32.gmra.mrb[0].mxu0 %v451
    %v539 = vpop.f32.mrb[0].mxu0
    %v540 = vadd.f32 0.0, %v539
    %v541 = vpop.f32.mrb[0].mxu0
    %542 = vmatprep.mubr.f32.mxu0 0.0
    %543 = vmatmul.mubr.f32.gmra.mrb[0].mxu0 %v453
    %v544 = vpop.f32.mrb[0].mxu0
    %v545 = vadd.f32 0.0, %v544
    %v546 = vpop.f32.mrb[0].mxu0
    %547 = vdwg.mxu0
    %v548 = vsel %vm201, %v530, -1e+30
    %v549 = vsel %vm202, %v535, -1e+30
    %v550 = vsel %vm203, %v540, -1e+30
    %v551 = vsel %vm204, %v545, -1e+30
    %v552 = vsel %vm323, %v548, -inf
    %553 = vmax.xlane.f32.xlu0 %v552
    %v554 = vpop.xlane.xlu0 %553
    %v555 = vsel %vm323, %v549, -inf
    %556 = vmax.xlane.f32.xlu0 %v555
    %v557 = vpop.xlane.xlu0 %556
    %v558 = vsel %vm323, %v550, -inf
    %559 = vmax.xlane.f32.xlu0 %v558
    %v560 = vpop.xlane.xlu0 %559
    %v561 = vsel %vm323, %v551, -inf
    %562 = vmax.xlane.f32.xlu0 %v561
    %v563 = vpop.xlane.xlu0 %562
    %v564 = vsub.f32 %v548, %v554
    %v565 = vsub.f32 %v549, %v557
    %v566 = vsub.f32 %v550, %v560
    %v567 = vsub.f32 %v551, %v563
    %v568 = vmul.f32 %v564, 1.442695
    %v569 = vpow.pop %v568
    %v570 = vmul.f32 %v565, 1.442695
    %v571 = vpow.pop %v570
    %v572 = vmul.f32 %v566, 1.442695
    %v573 = vpow.pop %v572
    %v574 = vmul.f32 %v567, 1.442695
    %v575 = vpow.pop %v574
    %v576 = vsel %vm323, %v569, 0.0
    %577 = vadd.xlane.f32.xlu0 %v576
    %v578 = vpop.xlane.xlu0 %577
    %v579 = vsel %vm323, %v571, 0.0
    %580 = vadd.xlane.f32.xlu0 %v579
    %v581 = vpop.xlane.xlu0 %580
    %v582 = vsel %vm323, %v573, 0.0
    %583 = vadd.xlane.f32.xlu0 %v582
    %v584 = vpop.xlane.xlu0 %583
    %v585 = vsel %vm323, %v575, 0.0
    %586 = vadd.xlane.f32.xlu0 %v585
    %v587 = vpop.xlane.xlu0 %586
    %v588 = vrcp.pop %v578
    %v589 = vrcp.pop %v581
    %v590 = vrcp.pop %v584
    %v591 = vrcp.pop %v587
    %v592 = vmul.f32 %v569, %v588
    %v593 = vmul.f32 %v571, %v589
    %v594 = vmul.f32 %v573, %v590
    %v595 = vmul.f32 %v575, %v591
    %v596 = vpack.c.bf16 %v593, %v592
    %v597 = vpack.c.bf16 %v595, %v594
    %600 = vrot.lane.b32.xlu0 %v370, 112
    %v601 = vpop.permute.xlu0 %600
    %602 = vrot.lane.b32.xlu0 %v371, 112
    %v603 = vpop.permute.xlu0 %602
    %v607 = vsel %vm323, %v596, 0
    %v610 = vsel %vm323, %v597, 0
    %612 = vmatprep.subr.bf16.mxu0 0
    %613 = vmatpush1.bf16.msra.mxu0 %v601
    %614 = vmatprep.subr.bf16.mxu0 0
    %615 = vmatpush1.bf16.msra.mxu0 %v603
    %616 = vmatprep.subr.bf16.mxu0 0
    %617 = vmatpush1.bf16.msra.mxu0 0
    %618 = vmatprep.subr.bf16.mxu0 0
    %619 = vmatpush1.bf16.msra.mxu0 0
    %620 = vmatprep.subr.bf16.mxu0 0
    %621 = vmatpush1.bf16.msra.mxu0 0
    %622 = vmatprep.subr.bf16.mxu0 0
    %623 = vmatpush1.bf16.msra.mxu0 0
    %624 = vmatprep.subr.bf16.mxu0 0
    %625 = vmatpush1.bf16.msra.mxu0 0
    %626 = vmatprep.subr.bf16.mxu0 0
    %627 = vmatpush1.bf16.msra.mxu0 0
    %628 = vmatprep.subr.bf16.mxu0 0
    %629 = vmatpush1.bf16.msra.mxu0 0
    %630 = vmatprep.subr.bf16.mxu0 0
    %631 = vmatpush1.bf16.msra.mxu0 0
    %632 = vmatprep.subr.bf16.mxu0 0
    %633 = vmatpush1.bf16.msra.mxu0 0
    %634 = vmatprep.subr.bf16.mxu0 0
    %635 = vmatpush1.bf16.msra.mxu0 0
    %636 = vmatprep.subr.bf16.mxu0 0
    %637 = vmatpush1.bf16.msra.mxu0 0
    %638 = vmatprep.subr.bf16.mxu0 0
    %639 = vmatpush1.bf16.msra.mxu0 0
    %640 = vmatprep.subr.bf16.mxu0 0
    %641 = vmatpush1.bf16.msra.mxu0 0
    %642 = vmatprep.subr.bf16.mxu0 0
    %643 = vmatpush1.bf16.msra.mxu0 0
    %644 = vmatprep.mubr.bf16.mxu0 0
    %645 = vmatmul.mubr.bf16.gmra.mrb[0].mxu0 %v607
    %v646 = vpop.f32.mrb[0].mxu0
    %v647 = vadd.f32 0.0, %v646
    %v648 = vpop.f32.mrb[0].mxu0
    %v649 = vpop.f32.mrb[0].mxu0
    %v650 = vadd.f32 0.0, %v649
    %v651 = vpop.f32.mrb[0].mxu0
    %652 = vmatprep.mubr.bf16.mxu0 0
    %653 = vmatmul.mubr.bf16.gmra.mrb[0].mxu0 %v610
    %v654 = vpop.f32.mrb[0].mxu0
    %v655 = vadd.f32 0.0, %v654
    %v656 = vpop.f32.mrb[0].mxu0
    %v657 = vpop.f32.mrb[0].mxu0
    %v658 = vadd.f32 0.0, %v657
    %v659 = vpop.f32.mrb[0].mxu0
    %660 = vdwg.mxu0
    %665 = vrot.lane.b32.xlu0 %v647, 16
    %v666 = vpop.permute.xlu0 %665
    %667 = vrot.lane.b32.xlu0 %v650, 16
    %v668 = vpop.permute.xlu0 %667
    %669 = vrot.lane.b32.xlu0 %v655, 16
    %v670 = vpop.permute.xlu0 %669
    %671 = vrot.lane.b32.xlu0 %v658, 16
    %v672 = vpop.permute.xlu0 %671
    %vm677 = vcmask 261248
    %678 = vst.msk [vmem:[#allocation2] sm:$0xff] %vm677, %v666
    %679 = vst.msk [vmem:[#allocation2 + $0x8] sm:$0xff] %vm677, %v668
    %680 = vst.msk [vmem:[#allocation2 + $0x10] sm:$0xff] %vm677, %v670
    %681 = vst.msk [vmem:[#allocation2 + $0x18] sm:$0xff] %vm677, %v672
    %682 = vrot.lane.b32.xlu0 %v156, 96
    %v683 = vpop.permute.xlu0 %682
    %684 = vrot.lane.b32.xlu0 %v160, 96
    %v685 = vpop.permute.xlu0 %684
    %686 = vrot.lane.b32.xlu0 %v166, 96
    %v687 = vpop.permute.xlu0 %686
    %688 = vrot.lane.b32.xlu0 %v170, 96
    %v689 = vpop.permute.xlu0 %688
    %690 = vrot.lane.b32.xlu0 %v156, 32
    %v691 = vpop.permute.xlu0 %690
    %692 = vrot.lane.b32.xlu0 %v160, 32
    %v693 = vpop.permute.xlu0 %692
    %694 = vrot.lane.b32.xlu0 %v166, 32
    %v695 = vpop.permute.xlu0 %694
    %696 = vrot.lane.b32.xlu0 %v170, 32
    %v697 = vpop.permute.xlu0 %696
    %v698 = vsel %vm217, %v683, 0
    %v700 = vsel %vm217, %v685, 0
    %v702 = vsel %vm217, %v687, 0
    %v704 = vsel %vm217, %v689, 0
    %v706 = vsel %vm217, %v691, 0
    %v708 = vsel %vm217, %v693, 0
    %v710 = vsel %vm217, %v695, 0
    %v712 = vsel %vm217, %v697, 0
    %714 = vmatprep.subr.mxu0 0.0
    %715 = vmatpush1.xpose.msra.mxu0 %v706
    %716 = vmatprep.subr.mxu0 0.0
    %717 = vmatpush1.xpose.msra.mxu0 %v708
    %718 = vmatprep.subr.mxu0 0.0
    %719 = vmatpush1.xpose.msra.mxu0 %v710
    %720 = vmatprep.subr.mxu0 0.0
    %721 = vmatpush1.xpose.msra.mxu0 %v712
    %722 = vmatprep.subr.mxu0 0.0
    %723 = vmatpush1.xpose.msra.mxu0 0.0
    %724 = vmatprep.subr.mxu0 0.0
    %725 = vmatpush1.xpose.msra.mxu0 0.0
    %726 = vmatprep.subr.mxu0 0.0
    %727 = vmatpush1.xpose.msra.mxu0 0.0
    %728 = vmatprep.subr.mxu0 0.0
    %729 = vmatpush1.xpose.msra.mxu0 0.0
    %730 = vmatprep.subr.mxu0 0.0
    %731 = vmatpush1.xpose.msra.mxu0 0.0
    %732 = vmatprep.subr.mxu0 0.0
    %733 = vmatpush1.xpose.msra.mxu0 0.0
    %734 = vmatprep.subr.mxu0 0.0
    %735 = vmatpush1.xpose.msra.mxu0 0.0
    %736 = vmatprep.subr.mxu0 0.0
    %737 = vmatpush1.xpose.msra.mxu0 0.0
    %738 = vmatprep.subr.mxu0 0.0
    %739 = vmatpush1.xpose.msra.mxu0 0.0
    %740 = vmatprep.subr.mxu0 0.0
    %741 = vmatpush1.xpose.msra.mxu0 0.0
    %742 = vmatprep.subr.mxu0 0.0
    %743 = vmatpush1.xpose.msra.mxu0 0.0
    %744 = vmatprep.subr.mxu0 0.0
    %745 = vmatpush1.xpose.msra.mxu0 0.0
    %746 = vmatprep.subr.mxu0 0.0
    %747 = vmatpush1.xpose.msra.mxu0 0.0
    %748 = vmatprep.subr.mxu0 0.0
    %749 = vmatpush1.xpose.msra.mxu0 0.0
    %750 = vmatprep.subr.mxu0 0.0
    %751 = vmatpush1.xpose.msra.mxu0 0.0
    %752 = vmatprep.subr.mxu0 0.0
    %753 = vmatpush1.xpose.msra.mxu0 0.0
    %754 = vmatprep.subr.mxu0 0.0
    %755 = vmatpush1.xpose.msra.mxu0 0.0
    %756 = vmatprep.subr.mxu0 0.0
    %757 = vmatpush1.xpose.msra.mxu0 0.0
    %758 = vmatprep.subr.mxu0 0.0
    %759 = vmatpush1.xpose.msra.mxu0 0.0
    %760 = vmatprep.subr.mxu0 0.0
    %761 = vmatpush1.xpose.msra.mxu0 0.0
    %762 = vmatprep.subr.mxu0 0.0
    %763 = vmatpush1.xpose.msra.mxu0 0.0
    %764 = vmatprep.subr.mxu0 0.0
    %765 = vmatpush1.xpose.msra.mxu0 0.0
    %766 = vmatprep.subr.mxu0 0.0
    %767 = vmatpush1.xpose.msra.mxu0 0.0
    %768 = vmatprep.subr.mxu0 0.0
    %769 = vmatpush1.xpose.msra.mxu0 0.0
    %770 = vmatprep.subr.mxu0 0.0
    %771 = vmatpush1.xpose.msra.mxu0 0.0
    %772 = vmatprep.subr.mxu0 0.0
    %773 = vmatpush1.xpose.msra.mxu0 0.0
    %774 = vmatprep.subr.mxu0 0.0
    %775 = vmatpush1.xpose.msra.mxu0 0.0
    %776 = vmatprep.subr.mxu0 0.0
    %777 = vmatpush1.xpose.msra.mxu0 0.0
    %778 = vmatprep.mubr.f32.mxu0 0.0
    %779 = vmatmul.mubr.f32.gmra.mrb[0].mxu0 %v698
    %v780 = vpop.f32.mrb[0].mxu0
    %v781 = vadd.f32 0.0, %v780
    %v782 = vpop.f32.mrb[0].mxu0
    %783 = vmatprep.mubr.f32.mxu0 0.0
    %784 = vmatmul.mubr.f32.gmra.mrb[0].mxu0 %v700
    %v785 = vpop.f32.mrb[0].mxu0
    %v786 = vadd.f32 0.0, %v785
    %v787 = vpop.f32.mrb[0].mxu0
    %788 = vmatprep.mubr.f32.mxu0 0.0
    %789 = vmatmul.mubr.f32.gmra.mrb[0].mxu0 %v702
    %v790 = vpop.f32.mrb[0].mxu0
    %v791 = vadd.f32 0.0, %v790
    %v792 = vpop.f32.mrb[0].mxu0
    %793 = vmatprep.mubr.f32.mxu0 0.0
    %794 = vmatmul.mubr.f32.gmra.mrb[0].mxu0 %v704
    %v795 = vpop.f32.mrb[0].mxu0
    %v796 = vadd.f32 0.0, %v795
    %v797 = vpop.f32.mrb[0].mxu0
    %798 = vdwg.mxu0
    %v799 = vsel %vm201, %v781, -1e+30
    %v800 = vsel %vm202, %v786, -1e+30
    %v801 = vsel %vm203, %v791, -1e+30
    %v802 = vsel %vm204, %v796, -1e+30
    %v803 = vsel %vm323, %v799, -inf
    %804 = vmax.xlane.f32.xlu0 %v803
    %v805 = vpop.xlane.xlu0 %804
    %v806 = vsel %vm323, %v800, -inf
    %807 = vmax.xlane.f32.xlu0 %v806
    %v808 = vpop.xlane.xlu0 %807
    %v809 = vsel %vm323, %v801, -inf
    %810 = vmax.xlane.f32.xlu0 %v809
    %v811 = vpop.xlane.xlu0 %810
    %v812 = vsel %vm323, %v802, -inf
    %813 = vmax.xlane.f32.xlu0 %v812
    %v814 = vpop.xlane.xlu0 %813
    %v815 = vsub.f32 %v799, %v805
    %v816 = vsub.f32 %v800, %v808
    %v817 = vsub.f32 %v801, %v811
    %v818 = vsub.f32 %v802, %v814
    %v819 = vmul.f32 %v815, 1.442695
    %v820 = vpow.pop %v819
    %v821 = vmul.f32 %v816, 1.442695
    %v822 = vpow.pop %v821
    %v823 = vmul.f32 %v817, 1.442695
    %v824 = vpow.pop %v823
    %v825 = vmul.f32 %v818, 1.442695
    %v826 = vpow.pop %v825
    %v827 = vsel %vm323, %v820, 0.0
    %828 = vadd.xlane.f32.xlu0 %v827
    %v829 = vpop.xlane.xlu0 %828
    %v830 = vsel %vm323, %v822, 0.0
    %831 = vadd.xlane.f32.xlu0 %v830
    %v832 = vpop.xlane.xlu0 %831
    %v833 = vsel %vm323, %v824, 0.0
    %834 = vadd.xlane.f32.xlu0 %v833
    %v835 = vpop.xlane.xlu0 %834
    %v836 = vsel %vm323, %v826, 0.0
    %837 = vadd.xlane.f32.xlu0 %v836
    %v838 = vpop.xlane.xlu0 %837
    %v839 = vrcp.pop %v829
    %v840 = vrcp.pop %v832
    %v841 = vrcp.pop %v835
    %v842 = vrcp.pop %v838
    %v843 = vmul.f32 %v820, %v839
    %v844 = vmul.f32 %v822, %v840
    %v845 = vmul.f32 %v824, %v841
    %v846 = vmul.f32 %v826, %v842
    %v847 = vpack.c.bf16 %v844, %v843
    %v848 = vpack.c.bf16 %v846, %v845
    %849 = vrot.lane.b32.xlu0 %v370, 96
    %v850 = vpop.permute.xlu0 %849
    %851 = vrot.lane.b32.xlu0 %v371, 96
    %v852 = vpop.permute.xlu0 %851
    %v856 = vsel %vm323, %v847, 0
    %v859 = vsel %vm323, %v848, 0
    %861 = vmatprep.subr.bf16.mxu0 0
    %862 = vmatpush1.bf16.msra.mxu0 %v850
    %863 = vmatprep.subr.bf16.mxu0 0
    %864 = vmatpush1.bf16.msra.mxu0 %v852
    %865 = vmatprep.subr.bf16.mxu0 0
    %866 = vmatpush1.bf16.msra.mxu0 0
    %867 = vmatprep.subr.bf16.mxu0 0
    %868 = vmatpush1.bf16.msra.mxu0 0
    %869 = vmatprep.subr.bf16.mxu0 0
    %870 = vmatpush1.bf16.msra.mxu0 0
    %871 = vmatprep.subr.bf16.mxu0 0
    %872 = vmatpush1.bf16.msra.mxu0 0
    %873 = vmatprep.subr.bf16.mxu0 0
    %874 = vmatpush1.bf16.msra.mxu0 0
    %875 = vmatprep.subr.bf16.mxu0 0
    %876 = vmatpush1.bf16.msra.mxu0 0
    %877 = vmatprep.subr.bf16.mxu0 0
    %878 = vmatpush1.bf16.msra.mxu0 0
    %879 = vmatprep.subr.bf16.mxu0 0
    %880 = vmatpush1.bf16.msra.mxu0 0
    %881 = vmatprep.subr.bf16.mxu0 0
    %882 = vmatpush1.bf16.msra.mxu0 0
    %883 = vmatprep.subr.bf16.mxu0 0
    %884 = vmatpush1.bf16.msra.mxu0 0
    %885 = vmatprep.subr.bf16.mxu0 0
    %886 = vmatpush1.bf16.msra.mxu0 0
    %887 = vmatprep.subr.bf16.mxu0 0
    %888 = vmatpush1.bf16.msra.mxu0 0
    %889 = vmatprep.subr.bf16.mxu0 0
    %890 = vmatpush1.bf16.msra.mxu0 0
    %891 = vmatprep.subr.bf16.mxu0 0
    %892 = vmatpush1.bf16.msra.mxu0 0
    %893 = vmatprep.mubr.bf16.mxu0 0
    %894 = vmatmul.mubr.bf16.gmra.mrb[0].mxu0 %v856
    %v895 = vpop.f32.mrb[0].mxu0
    %v896 = vadd.f32 0.0, %v895
    %v897 = vpop.f32.mrb[0].mxu0
    %v898 = vpop.f32.mrb[0].mxu0
    %v899 = vadd.f32 0.0, %v898
    %v900 = vpop.f32.mrb[0].mxu0
    %901 = vmatprep.mubr.bf16.mxu0 0
    %902 = vmatmul.mubr.bf16.gmra.mrb[0].mxu0 %v859
    %v903 = vpop.f32.mrb[0].mxu0
    %v904 = vadd.f32 0.0, %v903
    %v905 = vpop.f32.mrb[0].mxu0
    %v906 = vpop.f32.mrb[0].mxu0
    %v907 = vadd.f32 0.0, %v906
    %v908 = vpop.f32.mrb[0].mxu0
    %909 = vdwg.mxu0
    %914 = vrot.lane.b32.xlu0 %v896, 32
    %v915 = vpop.permute.xlu0 %914
    %916 = vrot.lane.b32.xlu0 %v899, 32
    %v917 = vpop.permute.xlu0 %916
    %918 = vrot.lane.b32.xlu0 %v904, 32
    %v919 = vpop.permute.xlu0 %918
    %920 = vrot.lane.b32.xlu0 %v907, 32
    %v921 = vpop.permute.xlu0 %920
    %vm926 = vcmask 392448
    %927 = vst.msk [vmem:[#allocation2] sm:$0xff] %vm926, %v915
    %928 = vst.msk [vmem:[#allocation2 + $0x8] sm:$0xff] %vm926, %v917
    %929 = vst.msk [vmem:[#allocation2 + $0x10] sm:$0xff] %vm926, %v919
    %930 = vst.msk [vmem:[#allocation2 + $0x18] sm:$0xff] %vm926, %v921
    %931 = vrot.lane.b32.xlu0 %v156, 80
    %v932 = vpop.permute.xlu0 %931
    %933 = vrot.lane.b32.xlu0 %v160, 80
    %v934 = vpop.permute.xlu0 %933
    %935 = vrot.lane.b32.xlu0 %v166, 80
    %v936 = vpop.permute.xlu0 %935
    %937 = vrot.lane.b32.xlu0 %v170, 80
    %v938 = vpop.permute.xlu0 %937
    %939 = vrot.lane.b32.xlu0 %v156, 16
    %v940 = vpop.permute.xlu0 %939
    %941 = vrot.lane.b32.xlu0 %v160, 16
    %v942 = vpop.permute.xlu0 %941
    %943 = vrot.lane.b32.xlu0 %v166, 16
    %v944 = vpop.permute.xlu0 %943
    %945 = vrot.lane.b32.xlu0 %v170, 16
    %v946 = vpop.permute.xlu0 %945
    %v947 = vsel %vm217, %v932, 0
    %v949 = vsel %vm217, %v934, 0
    %v951 = vsel %vm217, %v936, 0
    %v953 = vsel %vm217, %v938, 0
    %v955 = vsel %vm217, %v940, 0
    %v957 = vsel %vm217, %v942, 0
    %v959 = vsel %vm217, %v944, 0
    %v961 = vsel %vm217, %v946, 0
    %963 = vmatprep.subr.mxu0 0.0
    %964 = vmatpush1.xpose.msra.mxu0 %v955
    %965 = vmatprep.subr.mxu0 0.0
    %966 = vmatpush1.xpose.msra.mxu0 %v957
    %967 = vmatprep.subr.mxu0 0.0
    %968 = vmatpush1.xpose.msra.mxu0 %v959
    %969 = vmatprep.subr.mxu0 0.0
    %970 = vmatpush1.xpose.msra.mxu0 %v961
    %971 = vmatprep.subr.mxu0 0.0
    %972 = vmatpush1.xpose.msra.mxu0 0.0
    %973 = vmatprep.subr.mxu0 0.0
    %974 = vmatpush1.xpose.msra.mxu0 0.0
    %975 = vmatprep.subr.mxu0 0.0
    %976 = vmatpush1.xpose.msra.mxu0 0.0
    %977 = vmatprep.subr.mxu0 0.0
    %978 = vmatpush1.xpose.msra.mxu0 0.0
    %979 = vmatprep.subr.mxu0 0.0
    %980 = vmatpush1.xpose.msra.mxu0 0.0
    %981 = vmatprep.subr.mxu0 0.0
    %982 = vmatpush1.xpose.msra.mxu0 0.0
    %983 = vmatprep.subr.mxu0 0.0
    %984 = vmatpush1.xpose.msra.mxu0 0.0
    %985 = vmatprep.subr.mxu0 0.0
    %986 = vmatpush1.xpose.msra.mxu0 0.0
    %987 = vmatprep.subr.mxu0 0.0
    %988 = vmatpush1.xpose.msra.mxu0 0.0
    %989 = vmatprep.subr.mxu0 0.0
    %990 = vmatpush1.xpose.msra.mxu0 0.0
    %991 = vmatprep.subr.mxu0 0.0
    %992 = vmatpush1.xpose.msra.mxu0 0.0
    %993 = vmatprep.subr.mxu0 0.0
    %994 = vmatpush1.xpose.msra.mxu0 0.0
    %995 = vmatprep.subr.mxu0 0.0
    %996 = vmatpush1.xpose.msra.mxu0 0.0
    %997 = vmatprep.subr.mxu0 0.0
    %998 = vmatpush1.xpose.msra.mxu0 0.0
    %999 = vmatprep.subr.mxu0 0.0
    %1000 = vmatpush1.xpose.msra.mxu0 0.0
    %1001 = vmatprep.subr.mxu0 0.0
    %1002 = vmatpush1.xpose.msra.mxu0 0.0
    %1003 = vmatprep.subr.mxu0 0.0
    %1004 = vmatpush1.xpose.msra.mxu0 0.0
    %1005 = vmatprep.subr.mxu0 0.0
    %1006 = vmatpush1.xpose.msra.mxu0 0.0
    %1007 = vmatprep.subr.mxu0 0.0
    %1008 = vmatpush1.xpose.msra.mxu0 0.0
    %1009 = vmatprep.subr.mxu0 0.0
    %1010 = vmatpush1.xpose.msra.mxu0 0.0
    %1011 = vmatprep.subr.mxu0 0.0
    %1012 = vmatpush1.xpose.msra.mxu0 0.0
    %1013 = vmatprep.subr.mxu0 0.0
    %1014 = vmatpush1.xpose.msra.mxu0 0.0
    %1015 = vmatprep.subr.mxu0 0.0
    %1016 = vmatpush1.xpose.msra.mxu0 0.0
    %1017 = vmatprep.subr.mxu0 0.0
    %1018 = vmatpush1.xpose.msra.mxu0 0.0
    %1019 = vmatprep.subr.mxu0 0.0
    %1020 = vmatpush1.xpose.msra.mxu0 0.0
    %1021 = vmatprep.subr.mxu0 0.0
    %1022 = vmatpush1.xpose.msra.mxu0 0.0
    %1023 = vmatprep.subr.mxu0 0.0
    %1024 = vmatpush1.xpose.msra.mxu0 0.0
    %1025 = vmatprep.subr.mxu0 0.0
    %1026 = vmatpush1.xpose.msra.mxu0 0.0
    %1027 = vmatprep.mubr.f32.mxu0 0.0
    %1028 = vmatmul.mubr.f32.gmra.mrb[0].mxu0 %v947
    %v1029 = vpop.f32.mrb[0].mxu0
    %v1030 = vadd.f32 0.0, %v1029
    %v1031 = vpop.f32.mrb[0].mxu0
    %1032 = vmatprep.mubr.f32.mxu0 0.0
    %1033 = vmatmul.mubr.f32.gmra.mrb[0].mxu0 %v949
    %v1034 = vpop.f32.mrb[0].mxu0
    %v1035 = vadd.f32 0.0, %v1034
    %v1036 = vpop.f32.mrb[0].mxu0
    %1037 = vmatprep.mubr.f32.mxu0 0.0
    %1038 = vmatmul.mubr.f32.gmra.mrb[0].mxu0 %v951
    %v1039 = vpop.f32.mrb[0].mxu0
    %v1040 = vadd.f32 0.0, %v1039
    %v1041 = vpop.f32.mrb[0].mxu0
    %1042 = vmatprep.mubr.f32.mxu0 0.0
    %1043 = vmatmul.mubr.f32.gmra.mrb[0].mxu0 %v953
    %v1044 = vpop.f32.mrb[0].mxu0
    %v1045 = vadd.f32 0.0, %v1044
    %v1046 = vpop.f32.mrb[0].mxu0
    %1047 = vdwg.mxu0
    %v1048 = vsel %vm201, %v1030, -1e+30
    %v1049 = vsel %vm202, %v1035, -1e+30
    %v1050 = vsel %vm203, %v1040, -1e+30
    %v1051 = vsel %vm204, %v1045, -1e+30
    %v1052 = vsel %vm323, %v1048, -inf
    %1053 = vmax.xlane.f32.xlu0 %v1052
    %v1054 = vpop.xlane.xlu0 %1053
    %v1055 = vsel %vm323, %v1049, -inf
    %1056 = vmax.xlane.f32.xlu0 %v1055
    %v1057 = vpop.xlane.xlu0 %1056
    %v1058 = vsel %vm323, %v1050, -inf
    %1059 = vmax.xlane.f32.xlu0 %v1058
    %v1060 = vpop.xlane.xlu0 %1059
    %v1061 = vsel %vm323, %v1051, -inf
    %1062 = vmax.xlane.f32.xlu0 %v1061
    %v1063 = vpop.xlane.xlu0 %1062
    %v1064 = vsub.f32 %v1048, %v1054
    %v1065 = vsub.f32 %v1049, %v1057
    %v1066 = vsub.f32 %v1050, %v1060
    %v1067 = vsub.f32 %v1051, %v1063
    %v1068 = vmul.f32 %v1064, 1.442695
    %v1069 = vpow.pop %v1068
    %v1070 = vmul.f32 %v1065, 1.442695
    %v1071 = vpow.pop %v1070
    %v1072 = vmul.f32 %v1066, 1.442695
    %v1073 = vpow.pop %v1072
    %v1074 = vmul.f32 %v1067, 1.442695
    %v1075 = vpow.pop %v1074
    %v1076 = vsel %vm323, %v1069, 0.0
    %1077 = vadd.xlane.f32.xlu0 %v1076
    %v1078 = vpop.xlane.xlu0 %1077
    %v1079 = vsel %vm323, %v1071, 0.0
    %1080 = vadd.xlane.f32.xlu0 %v1079
    %v1081 = vpop.xlane.xlu0 %1080
    %v1082 = vsel %vm323, %v1073, 0.0
    %1083 = vadd.xlane.f32.xlu0 %v1082
    %v1084 = vpop.xlane.xlu0 %1083
    %v1085 = vsel %vm323, %v1075, 0.0
    %1086 = vadd.xlane.f32.xlu0 %v1085
    %v1087 = vpop.xlane.xlu0 %1086
    %v1088 = vrcp.pop %v1078
    %v1089 = vrcp.pop %v1081
    %v1090 = vrcp.pop %v1084
    %v1091 = vrcp.pop %v1087
    %v1092 = vmul.f32 %v1069, %v1088
    %v1093 = vmul.f32 %v1071, %v1089
    %v1094 = vmul.f32 %v1073, %v1090
    %v1095 = vmul.f32 %v1075, %v1091
    %v1096 = vpack.c.bf16 %v1093, %v1092
    %v1097 = vpack.c.bf16 %v1095, %v1094
    %1098 = vrot.lane.b32.xlu0 %v370, 80
    %v1099 = vpop.permute.xlu0 %1098
    %1100 = vrot.lane.b32.xlu0 %v371, 80
    %v1101 = vpop.permute.xlu0 %1100
    %v1105 = vsel %vm323, %v1096, 0
    %v1108 = vsel %vm323, %v1097, 0
    %1110 = vmatprep.subr.bf16.mxu0 0
    %1111 = vmatpush1.bf16.msra.mxu0 %v1099
    %1112 = vmatprep.subr.bf16.mxu0 0
    %1113 = vmatpush1.bf16.msra.mxu0 %v1101
    %1114 = vmatprep.subr.bf16.mxu0 0
    %1115 = vmatpush1.bf16.msra.mxu0 0
    %1116 = vmatprep.subr.bf16.mxu0 0
    %1117 = vmatpush1.bf16.msra.mxu0 0
    %1118 = vmatprep.subr.bf16.mxu0 0
    %1119 = vmatpush1.bf16.msra.mxu0 0
    %1120 = vmatprep.subr.bf16.mxu0 0
    %1121 = vmatpush1.bf16.msra.mxu0 0
    %1122 = vmatprep.subr.bf16.mxu0 0
    %1123 = vmatpush1.bf16.msra.mxu0 0
    %1124 = vmatprep.subr.bf16.mxu0 0
    %1125 = vmatpush1.bf16.msra.mxu0 0
    %1126 = vmatprep.subr.bf16.mxu0 0
    %1127 = vmatpush1.bf16.msra.mxu0 0
    %1128 = vmatprep.subr.bf16.mxu0 0
    %1129 = vmatpush1.bf16.msra.mxu0 0
    %1130 = vmatprep.subr.bf16.mxu0 0
    %1131 = vmatpush1.bf16.msra.mxu0 0
    %1132 = vmatprep.subr.bf16.mxu0 0
    %1133 = vmatpush1.bf16.msra.mxu0 0
    %1134 = vmatprep.subr.bf16.mxu0 0
    %1135 = vmatpush1.bf16.msra.mxu0 0
    %1136 = vmatprep.subr.bf16.mxu0 0
    %1137 = vmatpush1.bf16.msra.mxu0 0
    %1138 = vmatprep.subr.bf16.mxu0 0
    %1139 = vmatpush1.bf16.msra.mxu0 0
    %1140 = vmatprep.subr.bf16.mxu0 0
    %1141 = vmatpush1.bf16.msra.mxu0 0
    %1142 = vmatprep.mubr.bf16.mxu0 0
    %1143 = vmatmul.mubr.bf16.gmra.mrb[0].mxu0 %v1105
    %v1144 = vpop.f32.mrb[0].mxu0
    %v1145 = vadd.f32 0.0, %v1144
    %v1146 = vpop.f32.mrb[0].mxu0
    %v1147 = vpop.f32.mrb[0].mxu0
    %v1148 = vadd.f32 0.0, %v1147
    %v1149 = vpop.f32.mrb[0].mxu0
    %1150 = vmatprep.mubr.bf16.mxu0 0
    %1151 = vmatmul.mubr.bf16.gmra.mrb[0].mxu0 %v1108
    %v1152 = vpop.f32.mrb[0].mxu0
    %v1153 = vadd.f32 0.0, %v1152
    %v1154 = vpop.f32.mrb[0].mxu0
    %v1155 = vpop.f32.mrb[0].mxu0
    %v1156 = vadd.f32 0.0, %v1155
    %v1157 = vpop.f32.mrb[0].mxu0
    %1158 = vdwg.mxu0
    %1163 = vrot.lane.b32.xlu0 %v1145, 48
    %v1164 = vpop.permute.xlu0 %1163
    %1165 = vrot.lane.b32.xlu0 %v1148, 48
    %v1166 = vpop.permute.xlu0 %1165
    %1167 = vrot.lane.b32.xlu0 %v1153, 48
    %v1168 = vpop.permute.xlu0 %1167
    %1169 = vrot.lane.b32.xlu0 %v1156, 48
    %v1170 = vpop.permute.xlu0 %1169
    %vm1175 = vcmask 523648
    %1176 = vst.msk [vmem:[#allocation2] sm:$0xff] %vm1175, %v1164
    %1177 = vst.msk [vmem:[#allocation2 + $0x8] sm:$0xff] %vm1175, %v1166
    %1178 = vst.msk [vmem:[#allocation2 + $0x10] sm:$0xff] %vm1175, %v1168
    %1179 = vst.msk [vmem:[#allocation2 + $0x18] sm:$0xff] %vm1175, %v1170
    %1184 = vrot.lane.b32.xlu0 %v176, 64
    %v1185 = vpop.permute.xlu0 %1184
    %1186 = vrot.lane.b32.xlu0 %v180, 64
    %v1187 = vpop.permute.xlu0 %1186
    %1188 = vrot.lane.b32.xlu0 %v186, 64
    %v1189 = vpop.permute.xlu0 %1188
    %1190 = vrot.lane.b32.xlu0 %v190, 64
    %v1191 = vpop.permute.xlu0 %1190
    %v1192 = vsel %vm217, %v176, 0
    %v1194 = vsel %vm217, %v180, 0
    %v1196 = vsel %vm217, %v186, 0
    %v1198 = vsel %vm217, %v190, 0
    %v1200 = vsel %vm217, %v1185, 0
    %v1202 = vsel %vm217, %v1187, 0
    %v1204 = vsel %vm217, %v1189, 0
    %v1206 = vsel %vm217, %v1191, 0
    %1208 = vmatprep.subr.mxu0 0.0
    %1209 = vmatpush1.xpose.msra.mxu0 %v1200
    %1210 = vmatprep.subr.mxu0 0.0
    %1211 = vmatpush1.xpose.msra.mxu0 %v1202
    %1212 = vmatprep.subr.mxu0 0.0
    %1213 = vmatpush1.xpose.msra.mxu0 %v1204
    %1214 = vmatprep.subr.mxu0 0.0
    %1215 = vmatpush1.xpose.msra.mxu0 %v1206
    %1216 = vmatprep.subr.mxu0 0.0
    %1217 = vmatpush1.xpose.msra.mxu0 0.0
    %1218 = vmatprep.subr.mxu0 0.0
    %1219 = vmatpush1.xpose.msra.mxu0 0.0
    %1220 = vmatprep.subr.mxu0 0.0
    %1221 = vmatpush1.xpose.msra.mxu0 0.0
    %1222 = vmatprep.subr.mxu0 0.0
    %1223 = vmatpush1.xpose.msra.mxu0 0.0
    %1224 = vmatprep.subr.mxu0 0.0
    %1225 = vmatpush1.xpose.msra.mxu0 0.0
    %1226 = vmatprep.subr.mxu0 0.0
    %1227 = vmatpush1.xpose.msra.mxu0 0.0
    %1228 = vmatprep.subr.mxu0 0.0
    %1229 = vmatpush1.xpose.msra.mxu0 0.0
    %1230 = vmatprep.subr.mxu0 0.0
    %1231 = vmatpush1.xpose.msra.mxu0 0.0
    %1232 = vmatprep.subr.mxu0 0.0
    %1233 = vmatpush1.xpose.msra.mxu0 0.0
    %1234 = vmatprep.subr.mxu0 0.0
    %1235 = vmatpush1.xpose.msra.mxu0 0.0
    %1236 = vmatprep.subr.mxu0 0.0
    %1237 = vmatpush1.xpose.msra.mxu0 0.0
    %1238 = vmatprep.subr.mxu0 0.0
    %1239 = vmatpush1.xpose.msra.mxu0 0.0
    %1240 = vmatprep.subr.mxu0 0.0
    %1241 = vmatpush1.xpose.msra.mxu0 0.0
    %1242 = vmatprep.subr.mxu0 0.0
    %1243 = vmatpush1.xpose.msra.mxu0 0.0
    %1244 = vmatprep.subr.mxu0 0.0
    %1245 = vmatpush1.xpose.msra.mxu0 0.0
    %1246 = vmatprep.subr.mxu0 0.0
    %1247 = vmatpush1.xpose.msra.mxu0 0.0
    %1248 = vmatprep.subr.mxu0 0.0
    %1249 = vmatpush1.xpose.msra.mxu0 0.0
    %1250 = vmatprep.subr.mxu0 0.0
    %1251 = vmatpush1.xpose.msra.mxu0 0.0
    %1252 = vmatprep.subr.mxu0 0.0
    %1253 = vmatpush1.xpose.msra.mxu0 0.0
    %1254 = vmatprep.subr.mxu0 0.0
    %1255 = vmatpush1.xpose.msra.mxu0 0.0
    %1256 = vmatprep.subr.mxu0 0.0
    %1257 = vmatpush1.xpose.msra.mxu0 0.0
    %1258 = vmatprep.subr.mxu0 0.0
    %1259 = vmatpush1.xpose.msra.mxu0 0.0
    %1260 = vmatprep.subr.mxu0 0.0
    %1261 = vmatpush1.xpose.msra.mxu0 0.0
    %1262 = vmatprep.subr.mxu0 0.0
    %1263 = vmatpush1.xpose.msra.mxu0 0.0
    %1264 = vmatprep.subr.mxu0 0.0
    %1265 = vmatpush1.xpose.msra.mxu0 0.0
    %1266 = vmatprep.subr.mxu0 0.0
    %1267 = vmatpush1.xpose.msra.mxu0 0.0
    %1268 = vmatprep.subr.mxu0 0.0
    %1269 = vmatpush1.xpose.msra.mxu0 0.0
    %1270 = vmatprep.subr.mxu0 0.0
    %1271 = vmatpush1.xpose.msra.mxu0 0.0
    %1272 = vmatprep.mubr.f32.mxu0 0.0
    %1273 = vmatmul.mubr.f32.gmra.mrb[0].mxu0 %v1192
    %v1274 = vpop.f32.mrb[0].mxu0
    %v1275 = vadd.f32 0.0, %v1274
    %v1276 = vpop.f32.mrb[0].mxu0
    %1277 = vmatprep.mubr.f32.mxu0 0.0
    %1278 = vmatmul.mubr.f32.gmra.mrb[0].mxu0 %v1194
    %v1279 = vpop.f32.mrb[0].mxu0
    %v1280 = vadd.f32 0.0, %v1279
    %v1281 = vpop.f32.mrb[0].mxu0
    %1282 = vmatprep.mubr.f32.mxu0 0.0
    %1283 = vmatmul.mubr.f32.gmra.mrb[0].mxu0 %v1196
    %v1284 = vpop.f32.mrb[0].mxu0
    %v1285 = vadd.f32 0.0, %v1284
    %v1286 = vpop.f32.mrb[0].mxu0
    %1287 = vmatprep.mubr.f32.mxu0 0.0
    %1288 = vmatmul.mubr.f32.gmra.mrb[0].mxu0 %v1198
    %v1289 = vpop.f32.mrb[0].mxu0
    %v1290 = vadd.f32 0.0, %v1289
    %v1291 = vpop.f32.mrb[0].mxu0
    %1292 = vdwg.mxu0
    %v1293 = vsel %vm201, %v1275, -1e+30
    %v1294 = vsel %vm202, %v1280, -1e+30
    %v1295 = vsel %vm203, %v1285, -1e+30
    %v1296 = vsel %vm204, %v1290, -1e+30
    %v1297 = vsel %vm323, %v1293, -inf
    %1298 = vmax.xlane.f32.xlu0 %v1297
    %v1299 = vpop.xlane.xlu0 %1298
    %v1300 = vsel %vm323, %v1294, -inf
    %1301 = vmax.xlane.f32.xlu0 %v1300
    %v1302 = vpop.xlane.xlu0 %1301
    %v1303 = vsel %vm323, %v1295, -inf
    %1304 = vmax.xlane.f32.xlu0 %v1303
    %v1305 = vpop.xlane.xlu0 %1304
    %v1306 = vsel %vm323, %v1296, -inf
    %1307 = vmax.xlane.f32.xlu0 %v1306
    %v1308 = vpop.xlane.xlu0 %1307
    %v1309 = vsub.f32 %v1293, %v1299
    %v1310 = vsub.f32 %v1294, %v1302
    %v1311 = vsub.f32 %v1295, %v1305
    %v1312 = vsub.f32 %v1296, %v1308
    %v1313 = vmul.f32 %v1309, 1.442695
    %v1314 = vpow.pop %v1313
    %v1315 = vmul.f32 %v1310, 1.442695
    %v1316 = vpow.pop %v1315
    %v1317 = vmul.f32 %v1311, 1.442695
    %v1318 = vpow.pop %v1317
    %v1319 = vmul.f32 %v1312, 1.442695
    %v1320 = vpow.pop %v1319
    %v1321 = vsel %vm323, %v1314, 0.0
    %1322 = vadd.xlane.f32.xlu0 %v1321
    %v1323 = vpop.xlane.xlu0 %1322
    %v1324 = vsel %vm323, %v1316, 0.0
    %1325 = vadd.xlane.f32.xlu0 %v1324
    %v1326 = vpop.xlane.xlu0 %1325
    %v1327 = vsel %vm323, %v1318, 0.0
    %1328 = vadd.xlane.f32.xlu0 %v1327
    %v1329 = vpop.xlane.xlu0 %1328
    %v1330 = vsel %vm323, %v1320, 0.0
    %1331 = vadd.xlane.f32.xlu0 %v1330
    %v1332 = vpop.xlane.xlu0 %1331
    %v1333 = vrcp.pop %v1323
    %v1334 = vrcp.pop %v1326
    %v1335 = vrcp.pop %v1329
    %v1336 = vrcp.pop %v1332
    %v1337 = vmul.f32 %v1314, %v1333
    %v1338 = vmul.f32 %v1316, %v1334
    %v1339 = vmul.f32 %v1318, %v1335
    %v1340 = vmul.f32 %v1320, %v1336
    %v1341 = vpack.c.bf16 %v1338, %v1337
    %v1342 = vpack.c.bf16 %v1340, %v1339
    %v1343 = vpack.c.bf16 %v182, %v178
    %v1344 = vpack.c.bf16 %v192, %v188
    %v1346 = vsel %vm323, %v1341, 0
    %v1349 = vsel %vm323, %v1342, 0
    %1351 = vmatprep.subr.bf16.mxu0 0
    %1352 = vmatpush1.bf16.msra.mxu0 %v1343
    %1353 = vmatprep.subr.bf16.mxu0 0
    %1354 = vmatpush1.bf16.msra.mxu0 %v1344
    %1355 = vmatprep.subr.bf16.mxu0 0
    %1356 = vmatpush1.bf16.msra.mxu0 0
    %1357 = vmatprep.subr.bf16.mxu0 0
    %1358 = vmatpush1.bf16.msra.mxu0 0
    %1359 = vmatprep.subr.bf16.mxu0 0
    %1360 = vmatpush1.bf16.msra.mxu0 0
    %1361 = vmatprep.subr.bf16.mxu0 0
    %1362 = vmatpush1.bf16.msra.mxu0 0
    %1363 = vmatprep.subr.bf16.mxu0 0
    %1364 = vmatpush1.bf16.msra.mxu0 0
    %1365 = vmatprep.subr.bf16.mxu0 0
    %1366 = vmatpush1.bf16.msra.mxu0 0
    %1367 = vmatprep.subr.bf16.mxu0 0
    %1368 = vmatpush1.bf16.msra.mxu0 0
    %1369 = vmatprep.subr.bf16.mxu0 0
    %1370 = vmatpush1.bf16.msra.mxu0 0
    %1371 = vmatprep.subr.bf16.mxu0 0
    %1372 = vmatpush1.bf16.msra.mxu0 0
    %1373 = vmatprep.subr.bf16.mxu0 0
    %1374 = vmatpush1.bf16.msra.mxu0 0
    %1375 = vmatprep.subr.bf16.mxu0 0
    %1376 = vmatpush1.bf16.msra.mxu0 0
    %1377 = vmatprep.subr.bf16.mxu0 0
    %1378 = vmatpush1.bf16.msra.mxu0 0
    %1379 = vmatprep.subr.bf16.mxu0 0
    %1380 = vmatpush1.bf16.msra.mxu0 0
    %1381 = vmatprep.subr.bf16.mxu0 0
    %1382 = vmatpush1.bf16.msra.mxu0 0
    %1383 = vmatprep.mubr.bf16.mxu0 0
    %1384 = vmatmul.mubr.bf16.gmra.mrb[0].mxu0 %v1346
    %v1385 = vpop.f32.mrb[0].mxu0
    %v1386 = vadd.f32 0.0, %v1385
    %v1387 = vpop.f32.mrb[0].mxu0
    %v1388 = vpop.f32.mrb[0].mxu0
    %v1389 = vadd.f32 0.0, %v1388
    %v1390 = vpop.f32.mrb[0].mxu0
    %1391 = vmatprep.mubr.bf16.mxu0 0
    %1392 = vmatmul.mubr.bf16.gmra.mrb[0].mxu0 %v1349
    %v1393 = vpop.f32.mrb[0].mxu0
    %v1394 = vadd.f32 0.0, %v1393
    %v1395 = vpop.f32.mrb[0].mxu0
    %v1396 = vpop.f32.mrb[0].mxu0
    %v1397 = vadd.f32 0.0, %v1396
    %v1398 = vpop.f32.mrb[0].mxu0
    %1399 = vdwg.mxu0
    %1400 = vst.msk [vmem:[#allocation2 + $0x20] sm:$0xff] %vm217, %v1386
    %1401 = vst.msk [vmem:[#allocation2 + $0x28] sm:$0xff] %vm217, %v1389
    %1402 = vst.msk [vmem:[#allocation2 + $0x30] sm:$0xff] %vm217, %v1394
    %1403 = vst.msk [vmem:[#allocation2 + $0x38] sm:$0xff] %vm217, %v1397
    %1404 = vrot.lane.b32.xlu0 %v176, 112
    %v1405 = vpop.permute.xlu0 %1404
    %1406 = vrot.lane.b32.xlu0 %v180, 112
    %v1407 = vpop.permute.xlu0 %1406
    %1408 = vrot.lane.b32.xlu0 %v186, 112
    %v1409 = vpop.permute.xlu0 %1408
    %1410 = vrot.lane.b32.xlu0 %v190, 112
    %v1411 = vpop.permute.xlu0 %1410
    %1412 = vrot.lane.b32.xlu0 %v176, 48
    %v1413 = vpop.permute.xlu0 %1412
    %1414 = vrot.lane.b32.xlu0 %v180, 48
    %v1415 = vpop.permute.xlu0 %1414
    %1416 = vrot.lane.b32.xlu0 %v186, 48
    %v1417 = vpop.permute.xlu0 %1416
    %1418 = vrot.lane.b32.xlu0 %v190, 48
    %v1419 = vpop.permute.xlu0 %1418
    %v1420 = vsel %vm217, %v1405, 0
    %v1422 = vsel %vm217, %v1407, 0
    %v1424 = vsel %vm217, %v1409, 0
    %v1426 = vsel %vm217, %v1411, 0
    %v1428 = vsel %vm217, %v1413, 0
    %v1430 = vsel %vm217, %v1415, 0
    %v1432 = vsel %vm217, %v1417, 0
    %v1434 = vsel %vm217, %v1419, 0
    %1436 = vmatprep.subr.mxu0 0.0
    %1437 = vmatpush1.xpose.msra.mxu0 %v1428
    %1438 = vmatprep.subr.mxu0 0.0
    %1439 = vmatpush1.xpose.msra.mxu0 %v1430
    %1440 = vmatprep.subr.mxu0 0.0
    %1441 = vmatpush1.xpose.msra.mxu0 %v1432
    %1442 = vmatprep.subr.mxu0 0.0
    %1443 = vmatpush1.xpose.msra.mxu0 %v1434
    %1444 = vmatprep.subr.mxu0 0.0
    %1445 = vmatpush1.xpose.msra.mxu0 0.0
    %1446 = vmatprep.subr.mxu0 0.0
    %1447 = vmatpush1.xpose.msra.mxu0 0.0
    %1448 = vmatprep.subr.mxu0 0.0
    %1449 = vmatpush1.xpose.msra.mxu0 0.0
    %1450 = vmatprep.subr.mxu0 0.0
    %1451 = vmatpush1.xpose.msra.mxu0 0.0
    %1452 = vmatprep.subr.mxu0 0.0
    %1453 = vmatpush1.xpose.msra.mxu0 0.0
    %1454 = vmatprep.subr.mxu0 0.0
    %1455 = vmatpush1.xpose.msra.mxu0 0.0
    %1456 = vmatprep.subr.mxu0 0.0
    %1457 = vmatpush1.xpose.msra.mxu0 0.0
    %1458 = vmatprep.subr.mxu0 0.0
    %1459 = vmatpush1.xpose.msra.mxu0 0.0
    %1460 = vmatprep.subr.mxu0 0.0
    %1461 = vmatpush1.xpose.msra.mxu0 0.0
    %1462 = vmatprep.subr.mxu0 0.0
    %1463 = vmatpush1.xpose.msra.mxu0 0.0
    %1464 = vmatprep.subr.mxu0 0.0
    %1465 = vmatpush1.xpose.msra.mxu0 0.0
    %1466 = vmatprep.subr.mxu0 0.0
    %1467 = vmatpush1.xpose.msra.mxu0 0.0
    %1468 = vmatprep.subr.mxu0 0.0
    %1469 = vmatpush1.xpose.msra.mxu0 0.0
    %1470 = vmatprep.subr.mxu0 0.0
    %1471 = vmatpush1.xpose.msra.mxu0 0.0
    %1472 = vmatprep.subr.mxu0 0.0
    %1473 = vmatpush1.xpose.msra.mxu0 0.0
    %1474 = vmatprep.subr.mxu0 0.0
    %1475 = vmatpush1.xpose.msra.mxu0 0.0
    %1476 = vmatprep.subr.mxu0 0.0
    %1477 = vmatpush1.xpose.msra.mxu0 0.0
    %1478 = vmatprep.subr.mxu0 0.0
    %1479 = vmatpush1.xpose.msra.mxu0 0.0
    %1480 = vmatprep.subr.mxu0 0.0
    %1481 = vmatpush1.xpose.msra.mxu0 0.0
    %1482 = vmatprep.subr.mxu0 0.0
    %1483 = vmatpush1.xpose.msra.mxu0 0.0
    %1484 = vmatprep.subr.mxu0 0.0
    %1485 = vmatpush1.xpose.msra.mxu0 0.0
    %1486 = vmatprep.subr.mxu0 0.0
    %1487 = vmatpush1.xpose.msra.mxu0 0.0
    %1488 = vmatprep.subr.mxu0 0.0
    %1489 = vmatpush1.xpose.msra.mxu0 0.0
    %1490 = vmatprep.subr.mxu0 0.0
    %1491 = vmatpush1.xpose.msra.mxu0 0.0
    %1492 = vmatprep.subr.mxu0 0.0
    %1493 = vmatpush1.xpose.msra.mxu0 0.0
    %1494 = vmatprep.subr.mxu0 0.0
    %1495 = vmatpush1.xpose.msra.mxu0 0.0
    %1496 = vmatprep.subr.mxu0 0.0
    %1497 = vmatpush1.xpose.msra.mxu0 0.0
    %1498 = vmatprep.subr.mxu0 0.0
    %1499 = vmatpush1.xpose.msra.mxu0 0.0
    %1500 = vmatprep.mubr.f32.mxu0 0.0
    %1501 = vmatmul.mubr.f32.gmra.mrb[0].mxu0 %v1420
    %v1502 = vpop.f32.mrb[0].mxu0
    %v1503 = vadd.f32 0.0, %v1502
    %v1504 = vpop.f32.mrb[0].mxu0
    %1505 = vmatprep.mubr.f32.mxu0 0.0
    %1506 = vmatmul.mubr.f32.gmra.mrb[0].mxu0 %v1422
    %v1507 = vpop.f32.mrb[0].mxu0
    %v1508 = vadd.f32 0.0, %v1507
    %v1509 = vpop.f32.mrb[0].mxu0
    %1510 = vmatprep.mubr.f32.mxu0 0.0
    %1511 = vmatmul.mubr.f32.gmra.mrb[0].mxu0 %v1424
    %v1512 = vpop.f32.mrb[0].mxu0
    %v1513 = vadd.f32 0.0, %v1512
    %v1514 = vpop.f32.mrb[0].mxu0
    %1515 = vmatprep.mubr.f32.mxu0 0.0
    %1516 = vmatmul.mubr.f32.gmra.mrb[0].mxu0 %v1426
    %v1517 = vpop.f32.mrb[0].mxu0
    %v1518 = vadd.f32 0.0, %v1517
    %v1519 = vpop.f32.mrb[0].mxu0
    %1520 = vdwg.mxu0
    %v1521 = vsel %vm201, %v1503, -1e+30
    %v1522 = vsel %vm202, %v1508, -1e+30
    %v1523 = vsel %vm203, %v1513, -1e+30
    %v1524 = vsel %vm204, %v1518, -1e+30
    %v1525 = vsel %vm323, %v1521, -inf
    %1526 = vmax.xlane.f32.xlu0 %v1525
    %v1527 = vpop.xlane.xlu0 %1526
    %v1528 = vsel %vm323, %v1522, -inf
    %1529 = vmax.xlane.f32.xlu0 %v1528
    %v1530 = vpop.xlane.xlu0 %1529
    %v1531 = vsel %vm323, %v1523, -inf
    %1532 = vmax.xlane.f32.xlu0 %v1531
    %v1533 = vpop.xlane.xlu0 %1532
    %v1534 = vsel %vm323, %v1524, -inf
    %1535 = vmax.xlane.f32.xlu0 %v1534
    %v1536 = vpop.xlane.xlu0 %1535
    %v1537 = vsub.f32 %v1521, %v1527
    %v1538 = vsub.f32 %v1522, %v1530
    %v1539 = vsub.f32 %v1523, %v1533
    %v1540 = vsub.f32 %v1524, %v1536
    %v1541 = vmul.f32 %v1537, 1.442695
    %v1542 = vpow.pop %v1541
    %v1543 = vmul.f32 %v1538, 1.442695
    %v1544 = vpow.pop %v1543
    %v1545 = vmul.f32 %v1539, 1.442695
    %v1546 = vpow.pop %v1545
    %v1547 = vmul.f32 %v1540, 1.442695
    %v1548 = vpow.pop %v1547
    %v1549 = vsel %vm323, %v1542, 0.0
    %1550 = vadd.xlane.f32.xlu0 %v1549
    %v1551 = vpop.xlane.xlu0 %1550
    %v1552 = vsel %vm323, %v1544, 0.0
    %1553 = vadd.xlane.f32.xlu0 %v1552
    %v1554 = vpop.xlane.xlu0 %1553
    %v1555 = vsel %vm323, %v1546, 0.0
    %1556 = vadd.xlane.f32.xlu0 %v1555
    %v1557 = vpop.xlane.xlu0 %1556
    %v1558 = vsel %vm323, %v1548, 0.0
    %1559 = vadd.xlane.f32.xlu0 %v1558
    %v1560 = vpop.xlane.xlu0 %1559
    %v1561 = vrcp.pop %v1551
    %v1562 = vrcp.pop %v1554
    %v1563 = vrcp.pop %v1557
    %v1564 = vrcp.pop %v1560
    %v1565 = vmul.f32 %v1542, %v1561
    %v1566 = vmul.f32 %v1544, %v1562
    %v1567 = vmul.f32 %v1546, %v1563
    %v1568 = vmul.f32 %v1548, %v1564
    %v1569 = vpack.c.bf16 %v1566, %v1565
    %v1570 = vpack.c.bf16 %v1568, %v1567
    %1573 = vrot.lane.b32.xlu0 %v1343, 112
    %v1574 = vpop.permute.xlu0 %1573
    %1575 = vrot.lane.b32.xlu0 %v1344, 112
    %v1576 = vpop.permute.xlu0 %1575
    %v1580 = vsel %vm323, %v1569, 0
    %v1583 = vsel %vm323, %v1570, 0
    %1585 = vmatprep.subr.bf16.mxu0 0
    %1586 = vmatpush1.bf16.msra.mxu0 %v1574
    %1587 = vmatprep.subr.bf16.mxu0 0
    %1588 = vmatpush1.bf16.msra.mxu0 %v1576
    %1589 = vmatprep.subr.bf16.mxu0 0
    %1590 = vmatpush1.bf16.msra.mxu0 0
    %1591 = vmatprep.subr.bf16.mxu0 0
    %1592 = vmatpush1.bf16.msra.mxu0 0
    %1593 = vmatprep.subr.bf16.mxu0 0
    %1594 = vmatpush1.bf16.msra.mxu0 0
    %1595 = vmatprep.subr.bf16.mxu0 0
    %1596 = vmatpush1.bf16.msra.mxu0 0
    %1597 = vmatprep.subr.bf16.mxu0 0
    %1598 = vmatpush1.bf16.msra.mxu0 0
    %1599 = vmatprep.subr.bf16.mxu0 0
    %1600 = vmatpush1.bf16.msra.mxu0 0
    %1601 = vmatprep.subr.bf16.mxu0 0
    %1602 = vmatpush1.bf16.msra.mxu0 0
    %1603 = vmatprep.subr.bf16.mxu0 0
    %1604 = vmatpush1.bf16.msra.mxu0 0
    %1605 = vmatprep.subr.bf16.mxu0 0
    %1606 = vmatpush1.bf16.msra.mxu0 0
    %1607 = vmatprep.subr.bf16.mxu0 0
    %1608 = vmatpush1.bf16.msra.mxu0 0
    %1609 = vmatprep.subr.bf16.mxu0 0
    %1610 = vmatpush1.bf16.msra.mxu0 0
    %1611 = vmatprep.subr.bf16.mxu0 0
    %1612 = vmatpush1.bf16.msra.mxu0 0
    %1613 = vmatprep.subr.bf16.mxu0 0
    %1614 = vmatpush1.bf16.msra.mxu0 0
    %1615 = vmatprep.subr.bf16.mxu0 0
    %1616 = vmatpush1.bf16.msra.mxu0 0
    %1617 = vmatprep.mubr.bf16.mxu0 0
    %1618 = vmatmul.mubr.bf16.gmra.mrb[0].mxu0 %v1580
    %v1619 = vpop.f32.mrb[0].mxu0
    %v1620 = vadd.f32 0.0, %v1619
    %v1621 = vpop.f32.mrb[0].mxu0
    %v1622 = vpop.f32.mrb[0].mxu0
    %v1623 = vadd.f32 0.0, %v1622
    %v1624 = vpop.f32.mrb[0].mxu0
    %1625 = vmatprep.mubr.bf16.mxu0 0
    %1626 = vmatmul.mubr.bf16.gmra.mrb[0].mxu0 %v1583
    %v1627 = vpop.f32.mrb[0].mxu0
    %v1628 = vadd.f32 0.0, %v1627
    %v1629 = vpop.f32.mrb[0].mxu0
    %v1630 = vpop.f32.mrb[0].mxu0
    %v1631 = vadd.f32 0.0, %v1630
    %v1632 = vpop.f32.mrb[0].mxu0
    %1633 = vdwg.mxu0
    %1638 = vrot.lane.b32.xlu0 %v1620, 16
    %v1639 = vpop.permute.xlu0 %1638
    %1640 = vrot.lane.b32.xlu0 %v1623, 16
    %v1641 = vpop.permute.xlu0 %1640
    %1642 = vrot.lane.b32.xlu0 %v1628, 16
    %v1643 = vpop.permute.xlu0 %1642
    %1644 = vrot.lane.b32.xlu0 %v1631, 16
    %v1645 = vpop.permute.xlu0 %1644
    %1650 = vst.msk [vmem:[#allocation2 + $0x20] sm:$0xff] %vm677, %v1639
    %1651 = vst.msk [vmem:[#allocation2 + $0x28] sm:$0xff] %vm677, %v1641
    %1652 = vst.msk [vmem:[#allocation2 + $0x30] sm:$0xff] %vm677, %v1643
    %1653 = vst.msk [vmem:[#allocation2 + $0x38] sm:$0xff] %vm677, %v1645
    %1654 = vrot.lane.b32.xlu0 %v176, 96
    %v1655 = vpop.permute.xlu0 %1654
    %1656 = vrot.lane.b32.xlu0 %v180, 96
    %v1657 = vpop.permute.xlu0 %1656
    %1658 = vrot.lane.b32.xlu0 %v186, 96
    %v1659 = vpop.permute.xlu0 %1658
    %1660 = vrot.lane.b32.xlu0 %v190, 96
    %v1661 = vpop.permute.xlu0 %1660
    %1662 = vrot.lane.b32.xlu0 %v176, 32
    %v1663 = vpop.permute.xlu0 %1662
    %1664 = vrot.lane.b32.xlu0 %v180, 32
    %v1665 = vpop.permute.xlu0 %1664
    %1666 = vrot.lane.b32.xlu0 %v186, 32
    %v1667 = vpop.permute.xlu0 %1666
    %1668 = vrot.lane.b32.xlu0 %v190, 32
    %v1669 = vpop.permute.xlu0 %1668
    %v1670 = vsel %vm217, %v1655, 0
    %v1672 = vsel %vm217, %v1657, 0
    %v1674 = vsel %vm217, %v1659, 0
    %v1676 = vsel %vm217, %v1661, 0
    %v1678 = vsel %vm217, %v1663, 0
    %v1680 = vsel %vm217, %v1665, 0
    %v1682 = vsel %vm217, %v1667, 0
    %v1684 = vsel %vm217, %v1669, 0
    %1686 = vmatprep.subr.mxu0 0.0
    %1687 = vmatpush1.xpose.msra.mxu0 %v1678
    %1688 = vmatprep.subr.mxu0 0.0
    %1689 = vmatpush1.xpose.msra.mxu0 %v1680
    %1690 = vmatprep.subr.mxu0 0.0
    %1691 = vmatpush1.xpose.msra.mxu0 %v1682
    %1692 = vmatprep.subr.mxu0 0.0
    %1693 = vmatpush1.xpose.msra.mxu0 %v1684
    %1694 = vmatprep.subr.mxu0 0.0
    %1695 = vmatpush1.xpose.msra.mxu0 0.0
    %1696 = vmatprep.subr.mxu0 0.0
    %1697 = vmatpush1.xpose.msra.mxu0 0.0
    %1698 = vmatprep.subr.mxu0 0.0
    %1699 = vmatpush1.xpose.msra.mxu0 0.0
    %1700 = vmatprep.subr.mxu0 0.0
    %1701 = vmatpush1.xpose.msra.mxu0 0.0
    %1702 = vmatprep.subr.mxu0 0.0
    %1703 = vmatpush1.xpose.msra.mxu0 0.0
    %1704 = vmatprep.subr.mxu0 0.0
    %1705 = vmatpush1.xpose.msra.mxu0 0.0
    %1706 = vmatprep.subr.mxu0 0.0
    %1707 = vmatpush1.xpose.msra.mxu0 0.0
    %1708 = vmatprep.subr.mxu0 0.0
    %1709 = vmatpush1.xpose.msra.mxu0 0.0
    %1710 = vmatprep.subr.mxu0 0.0
    %1711 = vmatpush1.xpose.msra.mxu0 0.0
    %1712 = vmatprep.subr.mxu0 0.0
    %1713 = vmatpush1.xpose.msra.mxu0 0.0
    %1714 = vmatprep.subr.mxu0 0.0
    %1715 = vmatpush1.xpose.msra.mxu0 0.0
    %1716 = vmatprep.subr.mxu0 0.0
    %1717 = vmatpush1.xpose.msra.mxu0 0.0
    %1718 = vmatprep.subr.mxu0 0.0
    %1719 = vmatpush1.xpose.msra.mxu0 0.0
    %1720 = vmatprep.subr.mxu0 0.0
    %1721 = vmatpush1.xpose.msra.mxu0 0.0
    %1722 = vmatprep.subr.mxu0 0.0
    %1723 = vmatpush1.xpose.msra.mxu0 0.0
    %1724 = vmatprep.subr.mxu0 0.0
    %1725 = vmatpush1.xpose.msra.mxu0 0.0
    %1726 = vmatprep.subr.mxu0 0.0
    %1727 = vmatpush1.xpose.msra.mxu0 0.0
    %1728 = vmatprep.subr.mxu0 0.0
    %1729 = vmatpush1.xpose.msra.mxu0 0.0
    %1730 = vmatprep.subr.mxu0 0.0
    %1731 = vmatpush1.xpose.msra.mxu0 0.0
    %1732 = vmatprep.subr.mxu0 0.0
    %1733 = vmatpush1.xpose.msra.mxu0 0.0
    %1734 = vmatprep.subr.mxu0 0.0
    %1735 = vmatpush1.xpose.msra.mxu0 0.0
    %1736 = vmatprep.subr.mxu0 0.0
    %1737 = vmatpush1.xpose.msra.mxu0 0.0
    %1738 = vmatprep.subr.mxu0 0.0
    %1739 = vmatpush1.xpose.msra.mxu0 0.0
    %1740 = vmatprep.subr.mxu0 0.0
    %1741 = vmatpush1.xpose.msra.mxu0 0.0
    %1742 = vmatprep.subr.mxu0 0.0
    %1743 = vmatpush1.xpose.msra.mxu0 0.0
    %1744 = vmatprep.subr.mxu0 0.0
    %1745 = vmatpush1.xpose.msra.mxu0 0.0
    %1746 = vmatprep.subr.mxu0 0.0
    %1747 = vmatpush1.xpose.msra.mxu0 0.0
    %1748 = vmatprep.subr.mxu0 0.0
    %1749 = vmatpush1.xpose.msra.mxu0 0.0
    %1750 = vmatprep.mubr.f32.mxu0 0.0
    %1751 = vmatmul.mubr.f32.gmra.mrb[0].mxu0 %v1670
    %v1752 = vpop.f32.mrb[0].mxu0
    %v1753 = vadd.f32 0.0, %v1752
    %v1754 = vpop.f32.mrb[0].mxu0
    %1755 = vmatprep.mubr.f32.mxu0 0.0
    %1756 = vmatmul.mubr.f32.gmra.mrb[0].mxu0 %v1672
    %v1757 = vpop.f32.mrb[0].mxu0
    %v1758 = vadd.f32 0.0, %v1757
    %v1759 = vpop.f32.mrb[0].mxu0
    %1760 = vmatprep.mubr.f32.mxu0 0.0
    %1761 = vmatmul.mubr.f32.gmra.mrb[0].mxu0 %v1674
    %v1762 = vpop.f32.mrb[0].mxu0
    %v1763 = vadd.f32 0.0, %v1762
    %v1764 = vpop.f32.mrb[0].mxu0
    %1765 = vmatprep.mubr.f32.mxu0 0.0
    %1766 = vmatmul.mubr.f32.gmra.mrb[0].mxu0 %v1676
    %v1767 = vpop.f32.mrb[0].mxu0
    %v1768 = vadd.f32 0.0, %v1767
    %v1769 = vpop.f32.mrb[0].mxu0
    %1770 = vdwg.mxu0
    %v1771 = vsel %vm201, %v1753, -1e+30
    %v1772 = vsel %vm202, %v1758, -1e+30
    %v1773 = vsel %vm203, %v1763, -1e+30
    %v1774 = vsel %vm204, %v1768, -1e+30
    %v1775 = vsel %vm323, %v1771, -inf
    %1776 = vmax.xlane.f32.xlu0 %v1775
    %v1777 = vpop.xlane.xlu0 %1776
    %v1778 = vsel %vm323, %v1772, -inf
    %1779 = vmax.xlane.f32.xlu0 %v1778
    %v1780 = vpop.xlane.xlu0 %1779
    %v1781 = vsel %vm323, %v1773, -inf
    %1782 = vmax.xlane.f32.xlu0 %v1781
    %v1783 = vpop.xlane.xlu0 %1782
    %v1784 = vsel %vm323, %v1774, -inf
    %1785 = vmax.xlane.f32.xlu0 %v1784
    %v1786 = vpop.xlane.xlu0 %1785
    %v1787 = vsub.f32 %v1771, %v1777
    %v1788 = vsub.f32 %v1772, %v1780
    %v1789 = vsub.f32 %v1773, %v1783
    %v1790 = vsub.f32 %v1774, %v1786
    %v1791 = vmul.f32 %v1787, 1.442695
    %v1792 = vpow.pop %v1791
    %v1793 = vmul.f32 %v1788, 1.442695
    %v1794 = vpow.pop %v1793
    %v1795 = vmul.f32 %v1789, 1.442695
    %v1796 = vpow.pop %v1795
    %v1797 = vmul.f32 %v1790, 1.442695
    %v1798 = vpow.pop %v1797
    %v1799 = vsel %vm323, %v1792, 0.0
    %1800 = vadd.xlane.f32.xlu0 %v1799
    %v1801 = vpop.xlane.xlu0 %1800
    %v1802 = vsel %vm323, %v1794, 0.0
    %1803 = vadd.xlane.f32.xlu0 %v1802
    %v1804 = vpop.xlane.xlu0 %1803
    %v1805 = vsel %vm323, %v1796, 0.0
    %1806 = vadd.xlane.f32.xlu0 %v1805
    %v1807 = vpop.xlane.xlu0 %1806
    %v1808 = vsel %vm323, %v1798, 0.0
    %1809 = vadd.xlane.f32.xlu0 %v1808
    %v1810 = vpop.xlane.xlu0 %1809
    %v1811 = vrcp.pop %v1801
    %v1812 = vrcp.pop %v1804
    %v1813 = vrcp.pop %v1807
    %v1814 = vrcp.pop %v1810
    %v1815 = vmul.f32 %v1792, %v1811
    %v1816 = vmul.f32 %v1794, %v1812
    %v1817 = vmul.f32 %v1796, %v1813
    %v1818 = vmul.f32 %v1798, %v1814
    %v1819 = vpack.c.bf16 %v1816, %v1815
    %v1820 = vpack.c.bf16 %v1818, %v1817
    %1821 = vrot.lane.b32.xlu0 %v1343, 96
    %v1822 = vpop.permute.xlu0 %1821
    %1823 = vrot.lane.b32.xlu0 %v1344, 96
    %v1824 = vpop.permute.xlu0 %1823
    %v1828 = vsel %vm323, %v1819, 0
    %v1831 = vsel %vm323, %v1820, 0
    %1833 = vmatprep.subr.bf16.mxu0 0
    %1834 = vmatpush1.bf16.msra.mxu0 %v1822
    %1835 = vmatprep.subr.bf16.mxu0 0
    %1836 = vmatpush1.bf16.msra.mxu0 %v1824
    %1837 = vmatprep.subr.bf16.mxu0 0
    %1838 = vmatpush1.bf16.msra.mxu0 0
    %1839 = vmatprep.subr.bf16.mxu0 0
    %1840 = vmatpush1.bf16.msra.mxu0 0
    %1841 = vmatprep.subr.bf16.mxu0 0
    %1842 = vmatpush1.bf16.msra.mxu0 0
    %1843 = vmatprep.subr.bf16.mxu0 0
    %1844 = vmatpush1.bf16.msra.mxu0 0
    %1845 = vmatprep.subr.bf16.mxu0 0
    %1846 = vmatpush1.bf16.msra.mxu0 0
    %1847 = vmatprep.subr.bf16.mxu0 0
    %1848 = vmatpush1.bf16.msra.mxu0 0
    %1849 = vmatprep.subr.bf16.mxu0 0
    %1850 = vmatpush1.bf16.msra.mxu0 0
    %1851 = vmatprep.subr.bf16.mxu0 0
    %1852 = vmatpush1.bf16.msra.mxu0 0
    %1853 = vmatprep.subr.bf16.mxu0 0
    %1854 = vmatpush1.bf16.msra.mxu0 0
    %1855 = vmatprep.subr.bf16.mxu0 0
    %1856 = vmatpush1.bf16.msra.mxu0 0
    %1857 = vmatprep.subr.bf16.mxu0 0
    %1858 = vmatpush1.bf16.msra.mxu0 0
    %1859 = vmatprep.subr.bf16.mxu0 0
    %1860 = vmatpush1.bf16.msra.mxu0 0
    %1861 = vmatprep.subr.bf16.mxu0 0
    %1862 = vmatpush1.bf16.msra.mxu0 0
    %1863 = vmatprep.subr.bf16.mxu0 0
    %1864 = vmatpush1.bf16.msra.mxu0 0
    %1865 = vmatprep.mubr.bf16.mxu0 0
    %1866 = vmatmul.mubr.bf16.gmra.mrb[0].mxu0 %v1828
    %v1867 = vpop.f32.mrb[0].mxu0
    %v1868 = vadd.f32 0.0, %v1867
    %v1869 = vpop.f32.mrb[0].mxu0
    %v1870 = vpop.f32.mrb[0].mxu0
    %v1871 = vadd.f32 0.0, %v1870
    %v1872 = vpop.f32.mrb[0].mxu0
    %1873 = vmatprep.mubr.bf16.mxu0 0
    %1874 = vmatmul.mubr.bf16.gmra.mrb[0].mxu0 %v1831
    %v1875 = vpop.f32.mrb[0].mxu0
    %v1876 = vadd.f32 0.0, %v1875
    %v1877 = vpop.f32.mrb[0].mxu0
    %v1878 = vpop.f32.mrb[0].mxu0
    %v1879 = vadd.f32 0.0, %v1878
    %v1880 = vpop.f32.mrb[0].mxu0
    %1881 = vdwg.mxu0
    %1886 = vrot.lane.b32.xlu0 %v1868, 32
    %v1887 = vpop.permute.xlu0 %1886
    %1888 = vrot.lane.b32.xlu0 %v1871, 32
    %v1889 = vpop.permute.xlu0 %1888
    %1890 = vrot.lane.b32.xlu0 %v1876, 32
    %v1891 = vpop.permute.xlu0 %1890
    %1892 = vrot.lane.b32.xlu0 %v1879, 32
    %v1893 = vpop.permute.xlu0 %1892
    %1898 = vst.msk [vmem:[#allocation2 + $0x20] sm:$0xff] %vm926, %v1887
    %1899 = vst.msk [vmem:[#allocation2 + $0x28] sm:$0xff] %vm926, %v1889
    %1900 = vst.msk [vmem:[#allocation2 + $0x30] sm:$0xff] %vm926, %v1891
    %1901 = vst.msk [vmem:[#allocation2 + $0x38] sm:$0xff] %vm926, %v1893
    %1902 = vrot.lane.b32.xlu0 %v176, 80
    %v1903 = vpop.permute.xlu0 %1902
    %1904 = vrot.lane.b32.xlu0 %v180, 80
    %v1905 = vpop.permute.xlu0 %1904
    %1906 = vrot.lane.b32.xlu0 %v186, 80
    %v1907 = vpop.permute.xlu0 %1906
    %1908 = vrot.lane.b32.xlu0 %v190, 80
    %v1909 = vpop.permute.xlu0 %1908
    %1910 = vrot.lane.b32.xlu0 %v176, 16
    %v1911 = vpop.permute.xlu0 %1910
    %1912 = vrot.lane.b32.xlu0 %v180, 16
    %v1913 = vpop.permute.xlu0 %1912
    %1914 = vrot.lane.b32.xlu0 %v186, 16
    %v1915 = vpop.permute.xlu0 %1914
    %1916 = vrot.lane.b32.xlu0 %v190, 16
    %v1917 = vpop.permute.xlu0 %1916
    %v1918 = vsel %vm217, %v1903, 0
    %v1920 = vsel %vm217, %v1905, 0
    %v1922 = vsel %vm217, %v1907, 0
    %v1924 = vsel %vm217, %v1909, 0
    %v1926 = vsel %vm217, %v1911, 0
    %v1928 = vsel %vm217, %v1913, 0
    %v1930 = vsel %vm217, %v1915, 0
    %v1932 = vsel %vm217, %v1917, 0
    %1934 = vmatprep.subr.mxu0 0.0
    %1935 = vmatpush1.xpose.msra.mxu0 %v1926
    %1936 = vmatprep.subr.mxu0 0.0
    %1937 = vmatpush1.xpose.msra.mxu0 %v1928
    %1938 = vmatprep.subr.mxu0 0.0
    %1939 = vmatpush1.xpose.msra.mxu0 %v1930
    %1940 = vmatprep.subr.mxu0 0.0
    %1941 = vmatpush1.xpose.msra.mxu0 %v1932
    %1942 = vmatprep.subr.mxu0 0.0
    %1943 = vmatpush1.xpose.msra.mxu0 0.0
    %1944 = vmatprep.subr.mxu0 0.0
    %1945 = vmatpush1.xpose.msra.mxu0 0.0
    %1946 = vmatprep.subr.mxu0 0.0
    %1947 = vmatpush1.xpose.msra.mxu0 0.0
    %1948 = vmatprep.subr.mxu0 0.0
    %1949 = vmatpush1.xpose.msra.mxu0 0.0
    %1950 = vmatprep.subr.mxu0 0.0
    %1951 = vmatpush1.xpose.msra.mxu0 0.0
    %1952 = vmatprep.subr.mxu0 0.0
    %1953 = vmatpush1.xpose.msra.mxu0 0.0
    %1954 = vmatprep.subr.mxu0 0.0
    %1955 = vmatpush1.xpose.msra.mxu0 0.0
    %1956 = vmatprep.subr.mxu0 0.0
    %1957 = vmatpush1.xpose.msra.mxu0 0.0
    %1958 = vmatprep.subr.mxu0 0.0
    %1959 = vmatpush1.xpose.msra.mxu0 0.0
    %1960 = vmatprep.subr.mxu0 0.0
    %1961 = vmatpush1.xpose.msra.mxu0 0.0
    %1962 = vmatprep.subr.mxu0 0.0
    %1963 = vmatpush1.xpose.msra.mxu0 0.0
    %1964 = vmatprep.subr.mxu0 0.0
    %1965 = vmatpush1.xpose.msra.mxu0 0.0
    %1966 = vmatprep.subr.mxu0 0.0
    %1967 = vmatpush1.xpose.msra.mxu0 0.0
    %1968 = vmatprep.subr.mxu0 0.0
    %1969 = vmatpush1.xpose.msra.mxu0 0.0
    %1970 = vmatprep.subr.mxu0 0.0
    %1971 = vmatpush1.xpose.msra.mxu0 0.0
    %1972 = vmatprep.subr.mxu0 0.0
    %1973 = vmatpush1.xpose.msra.mxu0 0.0
    %1974 = vmatprep.subr.mxu0 0.0
    %1975 = vmatpush1.xpose.msra.mxu0 0.0
    %1976 = vmatprep.subr.mxu0 0.0
    %1977 = vmatpush1.xpose.msra.mxu0 0.0
    %1978 = vmatprep.subr.mxu0 0.0
    %1979 = vmatpush1.xpose.msra.mxu0 0.0
    %1980 = vmatprep.subr.mxu0 0.0
    %1981 = vmatpush1.xpose.msra.mxu0 0.0
    %1982 = vmatprep.subr.mxu0 0.0
    %1983 = vmatpush1.xpose.msra.mxu0 0.0
    %1984 = vmatprep.subr.mxu0 0.0
    %1985 = vmatpush1.xpose.msra.mxu0 0.0
    %1986 = vmatprep.subr.mxu0 0.0
    %1987 = vmatpush1.xpose.msra.mxu0 0.0
    %1988 = vmatprep.subr.mxu0 0.0
    %1989 = vmatpush1.xpose.msra.mxu0 0.0
    %1990 = vmatprep.subr.mxu0 0.0
    %1991 = vmatpush1.xpose.msra.mxu0 0.0
    %1992 = vmatprep.subr.mxu0 0.0
    %1993 = vmatpush1.xpose.msra.mxu0 0.0
    %1994 = vmatprep.subr.mxu0 0.0
    %1995 = vmatpush1.xpose.msra.mxu0 0.0
    %1996 = vmatprep.subr.mxu0 0.0
    %1997 = vmatpush1.xpose.msra.mxu0 0.0
    %1998 = vmatprep.mubr.f32.mxu0 0.0
    %1999 = vmatmul.mubr.f32.gmra.mrb[0].mxu0 %v1918
    %v2000 = vpop.f32.mrb[0].mxu0
    %v2001 = vadd.f32 0.0, %v2000
    %v2002 = vpop.f32.mrb[0].mxu0
    %2003 = vmatprep.mubr.f32.mxu0 0.0
    %2004 = vmatmul.mubr.f32.gmra.mrb[0].mxu0 %v1920
    %v2005 = vpop.f32.mrb[0].mxu0
    %v2006 = vadd.f32 0.0, %v2005
    %v2007 = vpop.f32.mrb[0].mxu0
    %2008 = vmatprep.mubr.f32.mxu0 0.0
    %2009 = vmatmul.mubr.f32.gmra.mrb[0].mxu0 %v1922
    %v2010 = vpop.f32.mrb[0].mxu0
    %v2011 = vadd.f32 0.0, %v2010
    %v2012 = vpop.f32.mrb[0].mxu0
    %2013 = vmatprep.mubr.f32.mxu0 0.0
    %2014 = vmatmul.mubr.f32.gmra.mrb[0].mxu0 %v1924
    %v2015 = vpop.f32.mrb[0].mxu0
    %v2016 = vadd.f32 0.0, %v2015
    %v2017 = vpop.f32.mrb[0].mxu0
    %2018 = vdwg.mxu0
    %v2019 = vsel %vm201, %v2001, -1e+30
    %v2020 = vsel %vm202, %v2006, -1e+30
    %v2021 = vsel %vm203, %v2011, -1e+30
    %v2022 = vsel %vm204, %v2016, -1e+30
    %v2023 = vsel %vm323, %v2019, -inf
    %2024 = vmax.xlane.f32.xlu0 %v2023
    %v2025 = vpop.xlane.xlu0 %2024
    %v2026 = vsel %vm323, %v2020, -inf
    %2027 = vmax.xlane.f32.xlu0 %v2026
    %v2028 = vpop.xlane.xlu0 %2027
    %v2029 = vsel %vm323, %v2021, -inf
    %2030 = vmax.xlane.f32.xlu0 %v2029
    %v2031 = vpop.xlane.xlu0 %2030
    %v2032 = vsel %vm323, %v2022, -inf
    %2033 = vmax.xlane.f32.xlu0 %v2032
    %v2034 = vpop.xlane.xlu0 %2033
    %v2035 = vsub.f32 %v2019, %v2025
    %v2036 = vsub.f32 %v2020, %v2028
    %v2037 = vsub.f32 %v2021, %v2031
    %v2038 = vsub.f32 %v2022, %v2034
    %v2039 = vmul.f32 %v2035, 1.442695
    %v2040 = vpow.pop %v2039
    %v2041 = vmul.f32 %v2036, 1.442695
    %v2042 = vpow.pop %v2041
    %v2043 = vmul.f32 %v2037, 1.442695
    %v2044 = vpow.pop %v2043
    %v2045 = vmul.f32 %v2038, 1.442695
    %v2046 = vpow.pop %v2045
    %v2047 = vsel %vm323, %v2040, 0.0
    %2048 = vadd.xlane.f32.xlu0 %v2047
    %v2049 = vpop.xlane.xlu0 %2048
    %v2050 = vsel %vm323, %v2042, 0.0
    %2051 = vadd.xlane.f32.xlu0 %v2050
    %v2052 = vpop.xlane.xlu0 %2051
    %v2053 = vsel %vm323, %v2044, 0.0
    %2054 = vadd.xlane.f32.xlu0 %v2053
    %v2055 = vpop.xlane.xlu0 %2054
    %v2056 = vsel %vm323, %v2046, 0.0
    %2057 = vadd.xlane.f32.xlu0 %v2056
    %v2058 = vpop.xlane.xlu0 %2057
    %v2059 = vrcp.pop %v2049
    %v2060 = vrcp.pop %v2052
    %v2061 = vrcp.pop %v2055
    %v2062 = vrcp.pop %v2058
    %v2063 = vmul.f32 %v2040, %v2059
    %v2064 = vmul.f32 %v2042, %v2060
    %v2065 = vmul.f32 %v2044, %v2061
    %v2066 = vmul.f32 %v2046, %v2062
    %v2067 = vpack.c.bf16 %v2064, %v2063
    %v2068 = vpack.c.bf16 %v2066, %v2065
    %2069 = vrot.lane.b32.xlu0 %v1343, 80
    %v2070 = vpop.permute.xlu0 %2069
    %2071 = vrot.lane.b32.xlu0 %v1344, 80
    %v2072 = vpop.permute.xlu0 %2071
    %v2076 = vsel %vm323, %v2067, 0
    %v2079 = vsel %vm323, %v2068, 0
    %2081 = vmatprep.subr.bf16.mxu0 0
    %2082 = vmatpush1.bf16.msra.mxu0 %v2070
    %2083 = vmatprep.subr.bf16.mxu0 0
    %2084 = vmatpush1.bf16.msra.mxu0 %v2072
    %2085 = vmatprep.subr.bf16.mxu0 0
    %2086 = vmatpush1.bf16.msra.mxu0 0
    %2087 = vmatprep.subr.bf16.mxu0 0
    %2088 = vmatpush1.bf16.msra.mxu0 0
    %2089 = vmatprep.subr.bf16.mxu0 0
    %2090 = vmatpush1.bf16.msra.mxu0 0
    %2091 = vmatprep.subr.bf16.mxu0 0
    %2092 = vmatpush1.bf16.msra.mxu0 0
    %2093 = vmatprep.subr.bf16.mxu0 0
    %2094 = vmatpush1.bf16.msra.mxu0 0
    %2095 = vmatprep.subr.bf16.mxu0 0
    %2096 = vmatpush1.bf16.msra.mxu0 0
    %2097 = vmatprep.subr.bf16.mxu0 0
    %2098 = vmatpush1.bf16.msra.mxu0 0
    %2099 = vmatprep.subr.bf16.mxu0 0
    %2100 = vmatpush1.bf16.msra.mxu0 0
    %2101 = vmatprep.subr.bf16.mxu0 0
    %2102 = vmatpush1.bf16.msra.mxu0 0
    %2103 = vmatprep.subr.bf16.mxu0 0
    %2104 = vmatpush1.bf16.msra.mxu0 0
    %2105 = vmatprep.subr.bf16.mxu0 0
    %2106 = vmatpush1.bf16.msra.mxu0 0
    %2107 = vmatprep.subr.bf16.mxu0 0
    %2108 = vmatpush1.bf16.msra.mxu0 0
    %2109 = vmatprep.subr.bf16.mxu0 0
    %2110 = vmatpush1.bf16.msra.mxu0 0
    %2111 = vmatprep.subr.bf16.mxu0 0
    %2112 = vmatpush1.bf16.msra.mxu0 0
    %2113 = vmatprep.mubr.bf16.mxu0 0
    %2114 = vmatmul.mubr.bf16.gmra.mrb[0].mxu0 %v2076
    %v2115 = vpop.f32.mrb[0].mxu0
    %v2116 = vadd.f32 0.0, %v2115
    %v2117 = vpop.f32.mrb[0].mxu0
    %v2118 = vpop.f32.mrb[0].mxu0
    %v2119 = vadd.f32 0.0, %v2118
    %v2120 = vpop.f32.mrb[0].mxu0
    %2121 = vmatprep.mubr.bf16.mxu0 0
    %2122 = vmatmul.mubr.bf16.gmra.mrb[0].mxu0 %v2079
    %v2123 = vpop.f32.mrb[0].mxu0
    %v2124 = vadd.f32 0.0, %v2123
    %v2125 = vpop.f32.mrb[0].mxu0
    %v2126 = vpop.f32.mrb[0].mxu0
    %v2127 = vadd.f32 0.0, %v2126
    %v2128 = vpop.f32.mrb[0].mxu0
    %2129 = vdwg.mxu0
    %2134 = vrot.lane.b32.xlu0 %v2116, 48
    %v2135 = vpop.permute.xlu0 %2134
    %2136 = vrot.lane.b32.xlu0 %v2119, 48
    %v2137 = vpop.permute.xlu0 %2136
    %2138 = vrot.lane.b32.xlu0 %v2124, 48
    %v2139 = vpop.permute.xlu0 %2138
    %2140 = vrot.lane.b32.xlu0 %v2127, 48
    %v2141 = vpop.permute.xlu0 %2140
    %2146 = vst.msk [vmem:[#allocation2 + $0x20] sm:$0xff] %vm1175, %v2135
    %2147 = vst.msk [vmem:[#allocation2 + $0x28] sm:$0xff] %vm1175, %v2137
    %2148 = vst.msk [vmem:[#allocation2 + $0x30] sm:$0xff] %vm1175, %v2139
    %2149 = vst.msk [vmem:[#allocation2 + $0x38] sm:$0xff] %vm1175, %v2141
    // Predicated region
    $region10: #{tpu_custom_call.1} parent=1 // pred_check
      _
    $region11: #{tpu_custom_call.1} parent=1 // pred_check_branch
      %2151 = sbr.rel (0) target = $region13
    $region12: #{tpu_custom_call.1} parent=1 // pred_region
      %s2153 = ssub.s32 1024, 1024
      %2154 = vsyncadd [#allocation3], %s2153
      %s2155 = sshll.u32 [#allocation2], 4
      %s2156 = int_to_ptr.vmem [resolvable:$true] %s2155
      %2161 = dma.vmem_to_hbm [thread:$0]  %s2156, 1024, %s2, [#allocation3], 128, 128, 8
    $region13: #{tpu_custom_call.1} parent=1 // pred_fallthru
      _
    // Predicated region
    $region14: #{tpu_custom_call.1} parent=1 // pred_check
      _
    $region15: #{tpu_custom_call.1} parent=1 // pred_check_branch
      %2163 = sbr.rel (0) target = $region17
    $region16: #{tpu_custom_call.1} parent=1 // pred_region
      %2164 = dma.done [#allocation3], 1024
    $region17: #{tpu_custom_call.1} parent=1 // pred_fallthru
      _
    %2165 = vsyncpa [#allocation3], 1

</llo_original>
